<compile_context>
chip_gen: v7x
topology: tpu7x:2x2x1
jax: 0.10.0
libtpu: 0.0.40
codegen_flags: <defaults>
</compile_context>

<pallas_src>
import functools
import numpy as np
import jax
import jax.numpy as jnp
from jax.experimental import pallas as pl
from jax.experimental.pallas import tpu as pltpu


def _block_basic_kernel(H, W, C, G, eps,
                        x_ref, b1_ref, b2_ref,
                        g1_ref, be1_ref, g2_ref, be2_ref,
                        gmat_ref, gmatt_ref, o_ref):
    """One grid step = one batch image.  Activations stay in the lane-dense
    fused layout (H, W*C); no VMEM scratch, no re-pad round trips."""
    WC = W * C
    n_per_group = float(H * W * (C // G))

    def conv3x3(src, b_ref):
        # src: (H, W*ci) fused channels-last rows.
        # b_ref: (3*W*ci, W*C) banded weight matrix (dx taps + column zero-pad
        # folded in); row zero-pad handled by the zero rows below.
        zr = jnp.zeros((1, src.shape[1]), jnp.float32)
        up = jnp.concatenate([zr, src[:-1, :]], axis=0)     # row y-1 (0 at top)
        down = jnp.concatenate([src[1:, :], zr], axis=0)    # row y+1 (0 at bottom)
        patches = jnp.concatenate([up, src, down], axis=1)  # (H, 3*W*ci)
        return jnp.dot(patches.astype(b_ref.dtype), b_ref[...],
                       preferred_element_type=jnp.float32)  # (H, W*C) f32

    def group_norm(h, gamma, beta):
        # h: (H, W*C); gamma/beta: (1, W*C) (per-channel params tiled over W).
        s = jnp.sum(h, axis=0, keepdims=True)                # (1, WC)
        ss = jnp.sum(h * h, axis=0, keepdims=True)           # (1, WC)
        stats = jnp.concatenate([s, ss], axis=0)             # (2, WC)
        gs = jnp.dot(stats, gmat_ref[...],
                     preferred_element_type=jnp.float32) / n_per_group  # (2, G)
        mean_g = gs[0:1]                                     # (1, G)
        var_g = jnp.maximum(gs[1:2] - mean_g * mean_g, 0.0)  # (1, G)
        mv = jnp.concatenate([mean_g, var_g], axis=0)        # (2, G)
        mv_c = jnp.dot(mv, gmatt_ref[...],
                       preferred_element_type=jnp.float32)   # (2, WC)
        inv = jax.lax.rsqrt(mv_c[1:2] + eps)
        return (h - mv_c[0:1]) * inv * gamma + beta

    x = x_ref[0]                                             # (H, W*Cin) -- also the shortcut

    # conv1 -> gn1 -> relu
    h = conv3x3(x, b1_ref)
    h = group_norm(h, g1_ref[...], be1_ref[...])
    h = jnp.maximum(h, 0.0)

    # conv2 -> gn2
    h = conv3x3(h, b2_ref)
    h = group_norm(h, g2_ref[...], be2_ref[...])

    # identity shortcut (stride == 1 and in_channels == channels) + relu
    # TODO(synk): option 'A' (1x1 strided conv) / option 'B' (pad-subsample)
    # projection shortcuts are not exercised by this configuration.
    o_ref[0] = jnp.maximum(h + x, 0.0).astype(o_ref.dtype)


def _banded_conv_weights(w, width, dtype):
    """OIHW 3x3 weights -> (3*W*Cin, W*Cout) banded matrix for the fused
    (H, W*C) activation layout.  Column (x) zero-padding is folded into the
    matrix; row (y) zero-padding is handled by zero rows in the kernel."""
    Cout, Cin, KH, KW = w.shape
    assert KH == 3 and KW == 3
    wt = jnp.transpose(w, (2, 3, 1, 0)).astype(jnp.float32)      # (dy, dx, ci, co)
    xs = jnp.arange(width)
    dxi = xs[:, None] - xs[None, :] + 1                          # (W, W): xp - x + 1
    valid = ((dxi >= 0) & (dxi <= 2)).astype(jnp.float32)
    dxi_c = jnp.clip(dxi, 0, 2)
    # b5[dy, xp, x, ci, co] = w[co, ci, dy, xp - x + 1] (0 if |xp - x| > 1)
    b5 = wt[:, dxi_c] * valid[None, :, :, None, None]            # (3, W, W, Cin, Cout)
    b = jnp.transpose(b5, (0, 1, 3, 2, 4)).reshape(3 * width * Cin, width * Cout)
    return b.astype(dtype)


def block_basic_forward(x_nchw, params, *, num_groups=8, eps=1e-5,
                        matmul_dtype=jnp.float32):
    w1, w2 = params["w1"], params["w2"]
    g1, b1, g2, b2 = params["g1"], params["b1"], params["g2"], params["b2"]

    N, Cin, H, W = x_nchw.shape
    C = w1.shape[0]
    G = num_groups
    assert Cin == C, "identity shortcut path requires in_channels == channels"
    WC = W * C

    # NCHW -> fused lane-dense NHWC: (N, H, W*Cin), contiguous 1 KiB+ rows.
    xf = jnp.transpose(x_nchw, (0, 2, 3, 1)).reshape(N, H, W * Cin).astype(jnp.float32)

    # Banded im2col weight matrices (built once on the host/XLA side).
    # Note: matmul_dtype=jnp.bfloat16 halves weight DMA/VMEM and doubles MXU
    # rate on v6e/v7x (f32 accumulation kept via preferred_element_type).
    b1m = _banded_conv_weights(w1, W, matmul_dtype)              # (3*W*Cin, W*C)
    b2m = _banded_conv_weights(w2, W, matmul_dtype)              # (3*W*C,  W*C)

    # GroupNorm helpers in the fused layout.
    cg = C // G
    ch = jnp.arange(WC) % C
    gmat = (ch[:, None] // cg == jnp.arange(G)[None, :]).astype(jnp.float32)  # (WC, G)
    gmatt = gmat.T                                                            # (G, WC)

    g1f = jnp.tile(g1.astype(jnp.float32), W).reshape(1, WC)
    b1f = jnp.tile(b1.astype(jnp.float32), W).reshape(1, WC)
    g2f = jnp.tile(g2.astype(jnp.float32), W).reshape(1, WC)
    b2f = jnp.tile(b2.astype(jnp.float32), W).reshape(1, WC)

    kernel = functools.partial(_block_basic_kernel, H, W, C, G, eps)

    def const_spec(shape):
        return pl.BlockSpec(shape, lambda b: (0,) * len(shape))

    out_f = pl.pallas_call(
        kernel,
        out_shape=jax.ShapeDtypeStruct((N, H, WC), jnp.float32),
        grid_spec=pltpu.PrefetchScalarGridSpec(
            num_scalar_prefetch=0,
            grid=(N,),
            in_specs=[
                pl.BlockSpec((1, H, W * Cin), lambda b: (b, 0, 0)),  # x (also shortcut)
                const_spec((3 * W * Cin, WC)),                       # banded conv1 weights
                const_spec((3 * WC, WC)),                            # banded conv2 weights
                const_spec((1, WC)), const_spec((1, WC)),            # gn1 gamma/beta (tiled)
                const_spec((1, WC)), const_spec((1, WC)),            # gn2 gamma/beta (tiled)
                const_spec((WC, G)), const_spec((G, WC)),            # group one-hot maps
            ],
            out_specs=pl.BlockSpec((1, H, WC), lambda b: (b, 0, 0)),
        ),
        compiler_params=pltpu.CompilerParams(dimension_semantics=("parallel",)),
    )(xf, b1m, b2m, g1f, b1f, g2f, b2f, gmat, gmatt)

    # fused (N, H, W*C) -> NCHW
    return jnp.transpose(out_f.reshape(N, H, W, C), (0, 3, 1, 2))


def _ref_forward(x, w1, w2, g1, b1, g2, b2, G=8, eps=1e-5):
    """Pure-JAX reference (NCHW) mirroring the PyTorch module."""
    def conv(h, w):
        return jax.lax.conv_general_dilated(
            h, w, window_strides=(1, 1), padding=((1, 1), (1, 1)),
            dimension_numbers=("NCHW", "OIHW", "NCHW"))

    def gn(h, gamma, beta):
        N, C, H, W = h.shape
        hg = h.reshape(N, G, C // G, H * W)
        mean = hg.mean(axis=(2, 3), keepdims=True)
        var = hg.var(axis=(2, 3), keepdims=True)
        hn = ((hg - mean) * jax.lax.rsqrt(var + eps)).reshape(N, C, H, W)
        return hn * gamma[None, :, None, None] + beta[None, :, None, None]

    h = jax.nn.relu(gn(conv(x, w1), g1, b1))
    h = gn(conv(h, w2), g2, b2)
    return jax.nn.relu(h + x)


if __name__ == "__main__":
    # blockBasic(in_channels=16, channels=16, stride=1, num_groups=8) -> identity shortcut
    N, Cin, C, H, W, G = 2, 16, 16, 16, 16, 8
    key = jax.random.PRNGKey(0)
    ks = jax.random.split(key, 7)

    w1 = jax.random.normal(ks[0], (C, Cin, 3, 3), jnp.float32) * (2.0 / (Cin * 9)) ** 0.5
    w2 = jax.random.normal(ks[1], (C, C, 3, 3), jnp.float32) * (2.0 / (C * 9)) ** 0.5
    g1 = 1.0 + 0.1 * jax.random.normal(ks[2], (C,), jnp.float32)
    b1 = 0.1 * jax.random.normal(ks[3], (C,), jnp.float32)
    g2 = 1.0 + 0.1 * jax.random.normal(ks[4], (C,), jnp.float32)
    b2 = 0.1 * jax.random.normal(ks[5], (C,), jnp.float32)
    x = jax.random.normal(ks[6], (N, Cin, H, W), jnp.float32)

    params = dict(w1=w1, w2=w2, g1=g1, b1=b1, g2=g2, b2=b2)

    out = jax.block_until_ready(block_basic_forward(x, params, num_groups=G))
    ref = jax.block_until_ready(_ref_forward(x, w1, w2, g1, b1, g2, b2, G=G))

    assert out.shape == (N, C, H, W)
    np.testing.assert_allclose(np.asarray(out), np.asarray(ref), rtol=1e-3, atol=1e-3)
    print("KERNEL_OK")
</pallas_src>

<mosaic_0001>
module attributes {stable_mosaic.version = 11 : i64} {
  func.func @_block_basic_kernel(%arg0: i32, %arg1: memref<1x16x256xf32, #tpu.memory_space<vmem>>, %arg2: memref<768x256xf32, #tpu.memory_space<vmem>>, %arg3: memref<768x256xf32, #tpu.memory_space<vmem>>, %arg4: memref<1x256xf32, #tpu.memory_space<vmem>>, %arg5: memref<1x256xf32, #tpu.memory_space<vmem>>, %arg6: memref<1x256xf32, #tpu.memory_space<vmem>>, %arg7: memref<1x256xf32, #tpu.memory_space<vmem>>, %arg8: memref<256x8xf32, #tpu.memory_space<vmem>>, %arg9: memref<8x256xf32, #tpu.memory_space<vmem>>, %arg10: memref<1x16x256xf32, #tpu.memory_space<vmem>>) attributes {dimension_semantics = [#tpu.dimension_semantics<parallel>], iteration_bounds = array<i64: 2>, scalar_prefetch = 0 : i64, scratch_operands = 0 : i64, tpu.core_type = #tpu.core_type<tc>, window_params = [{transform_indices = @transform_0, window_bounds = array<i64: 1, 16, 256>}, {pipeline_mode = #tpu.pipeline_mode<synchronous>, transform_indices = @transform_1, window_bounds = array<i64: 768, 256>}, {pipeline_mode = #tpu.pipeline_mode<synchronous>, transform_indices = @transform_2, window_bounds = array<i64: 768, 256>}, {pipeline_mode = #tpu.pipeline_mode<synchronous>, transform_indices = @transform_3, window_bounds = array<i64: 1, 256>}, {pipeline_mode = #tpu.pipeline_mode<synchronous>, transform_indices = @transform_4, window_bounds = array<i64: 1, 256>}, {pipeline_mode = #tpu.pipeline_mode<synchronous>, transform_indices = @transform_5, window_bounds = array<i64: 1, 256>}, {pipeline_mode = #tpu.pipeline_mode<synchronous>, transform_indices = @transform_6, window_bounds = array<i64: 1, 256>}, {pipeline_mode = #tpu.pipeline_mode<synchronous>, transform_indices = @transform_7, window_bounds = array<i64: 256, 8>}, {pipeline_mode = #tpu.pipeline_mode<synchronous>, transform_indices = @transform_8, window_bounds = array<i64: 8, 256>}, {transform_indices = @transform_9, window_bounds = array<i64: 1, 16, 256>}]} {
    %c0 = arith.constant 0 : index
    %c0_0 = arith.constant 0 : index
    %c0_1 = arith.constant 0 : index
    %0 = vector.load %arg1[%c0, %c0_0, %c0_1] : memref<1x16x256xf32, #tpu.memory_space<vmem>>, vector<1x16x256xf32>
    %1 = vector.shape_cast %0 : vector<1x16x256xf32> to vector<16x256xf32>
    %cst = arith.constant 0.000000e+00 : f32
    %2 = vector.broadcast %cst : f32 to vector<1x256xf32>
    %3 = vector.extract_strided_slice %1 {offsets = [0, 0], sizes = [15, 256], strides = [1, 1]} : vector<16x256xf32> to vector<15x256xf32>
    %4 = tpu.concatenate %2, %3 in 0 : vector<1x256xf32>, vector<15x256xf32> -> vector<16x256xf32>
    %5 = vector.extract_strided_slice %1 {offsets = [1, 0], sizes = [15, 256], strides = [1, 1]} : vector<16x256xf32> to vector<15x256xf32>
    %6 = tpu.concatenate %5, %2 in 0 : vector<15x256xf32>, vector<1x256xf32> -> vector<16x256xf32>
    %7 = tpu.concatenate %4, %1, %6 in 1 : vector<16x256xf32>, vector<16x256xf32>, vector<16x256xf32> -> vector<16x768xf32>
    %c0_2 = arith.constant 0 : index
    %c0_3 = arith.constant 0 : index
    %8 = vector.load %arg2[%c0_2, %c0_3] : memref<768x256xf32, #tpu.memory_space<vmem>>, vector<768x256xf32>
    %cst_4 = arith.constant dense<0.000000e+00> : vector<16x256xf32>
    %9 = tpu.matmul %7, %8, %cst_4 {dimension_numbers = #tpu.dot_dimension_numbers<[1], [0], [0], [1], [0, 0, 1, 1], [], []>} : vector<16x768xf32>, vector<768x256xf32>, vector<16x256xf32> -> vector<16x256xf32>
    %c0_5 = arith.constant 0 : index
    %c0_6 = arith.constant 0 : index
    %10 = vector.load %arg4[%c0_5, %c0_6] : memref<1x256xf32, #tpu.memory_space<vmem>>, vector<1x256xf32>
    %c0_7 = arith.constant 0 : index
    %c0_8 = arith.constant 0 : index
    %11 = vector.load %arg5[%c0_7, %c0_8] : memref<1x256xf32, #tpu.memory_space<vmem>>, vector<1x256xf32>
    %cst_9 = arith.constant dense<0.000000e+00> : vector<256xf32>
    %12 = vector.multi_reduction <add>, %9, %cst_9 [0] : vector<16x256xf32> to vector<256xf32>
    %13 = vector.shape_cast %12 : vector<256xf32> to vector<1x256xf32>
    %14 = arith.mulf %9, %9 : vector<16x256xf32>
    %cst_10 = arith.constant dense<0.000000e+00> : vector<256xf32>
    %15 = vector.multi_reduction <add>, %14, %cst_10 [0] : vector<16x256xf32> to vector<256xf32>
    %16 = vector.shape_cast %15 : vector<256xf32> to vector<1x256xf32>
    %17 = tpu.concatenate %13, %16 in 0 : vector<1x256xf32>, vector<1x256xf32> -> vector<2x256xf32>
    %c0_11 = arith.constant 0 : index
    %c0_12 = arith.constant 0 : index
    %18 = vector.load %arg8[%c0_11, %c0_12] : memref<256x8xf32, #tpu.memory_space<vmem>>, vector<256x8xf32>
    %cst_13 = arith.constant dense<0.000000e+00> : vector<2x8xf32>
    %19 = tpu.matmul %17, %18, %cst_13 {dimension_numbers = #tpu.dot_dimension_numbers<[1], [0], [0], [1], [0, 0, 1, 1], [], []>} : vector<2x256xf32>, vector<256x8xf32>, vector<2x8xf32> -> vector<2x8xf32>
    %cst_14 = arith.constant 5.120000e+02 : f32
    %20 = vector.broadcast %cst_14 : f32 to vector<2x8xf32>
    %21 = arith.divf %19, %20 : vector<2x8xf32>
    %22 = vector.extract_strided_slice %21 {offsets = [0, 0], sizes = [1, 8], strides = [1, 1]} : vector<2x8xf32> to vector<1x8xf32>
    %23 = vector.extract_strided_slice %21 {offsets = [1, 0], sizes = [1, 8], strides = [1, 1]} : vector<2x8xf32> to vector<1x8xf32>
    %24 = arith.mulf %22, %22 : vector<1x8xf32>
    %25 = arith.subf %23, %24 : vector<1x8xf32>
    %cst_15 = arith.constant 0.000000e+00 : f32
    %26 = vector.broadcast %cst_15 : f32 to vector<1x8xf32>
    %27 = arith.maximumf %25, %26 : vector<1x8xf32>
    %28 = tpu.concatenate %22, %27 in 0 : vector<1x8xf32>, vector<1x8xf32> -> vector<2x8xf32>
    %c0_16 = arith.constant 0 : index
    %c0_17 = arith.constant 0 : index
    %29 = vector.load %arg9[%c0_16, %c0_17] : memref<8x256xf32, #tpu.memory_space<vmem>>, vector<8x256xf32>
    %cst_18 = arith.constant dense<0.000000e+00> : vector<2x256xf32>
    %30 = tpu.matmul %28, %29, %cst_18 {dimension_numbers = #tpu.dot_dimension_numbers<[1], [0], [0], [1], [0, 0, 1, 1], [], []>} : vector<2x8xf32>, vector<8x256xf32>, vector<2x256xf32> -> vector<2x256xf32>
    %31 = vector.extract_strided_slice %30 {offsets = [1, 0], sizes = [1, 256], strides = [1, 1]} : vector<2x256xf32> to vector<1x256xf32>
    %cst_19 = arith.constant 9.99999974E-6 : f32
    %32 = vector.broadcast %cst_19 : f32 to vector<1x256xf32>
    %33 = arith.addf %31, %32 : vector<1x256xf32>
    %34 = math.rsqrt %33 : vector<1x256xf32>
    %35 = vector.extract_strided_slice %30 {offsets = [0, 0], sizes = [1, 256], strides = [1, 1]} : vector<2x256xf32> to vector<1x256xf32>
    %36 = vector.broadcast %35 : vector<1x256xf32> to vector<16x256xf32>
    %37 = arith.subf %9, %36 : vector<16x256xf32>
    %38 = vector.broadcast %34 : vector<1x256xf32> to vector<16x256xf32>
    %39 = arith.mulf %37, %38 : vector<16x256xf32>
    %40 = vector.broadcast %10 : vector<1x256xf32> to vector<16x256xf32>
    %41 = arith.mulf %39, %40 : vector<16x256xf32>
    %42 = vector.broadcast %11 : vector<1x256xf32> to vector<16x256xf32>
    %43 = arith.addf %41, %42 : vector<16x256xf32>
    %cst_20 = arith.constant 0.000000e+00 : f32
    %44 = vector.broadcast %cst_20 : f32 to vector<16x256xf32>
    %45 = arith.maximumf %43, %44 : vector<16x256xf32>
    %cst_21 = arith.constant 0.000000e+00 : f32
    %46 = vector.broadcast %cst_21 : f32 to vector<1x256xf32>
    %47 = vector.extract_strided_slice %45 {offsets = [0, 0], sizes = [15, 256], strides = [1, 1]} : vector<16x256xf32> to vector<15x256xf32>
    %48 = tpu.concatenate %46, %47 in 0 : vector<1x256xf32>, vector<15x256xf32> -> vector<16x256xf32>
    %49 = vector.extract_strided_slice %45 {offsets = [1, 0], sizes = [15, 256], strides = [1, 1]} : vector<16x256xf32> to vector<15x256xf32>
    %50 = tpu.concatenate %49, %46 in 0 : vector<15x256xf32>, vector<1x256xf32> -> vector<16x256xf32>
    %51 = tpu.concatenate %48, %45, %50 in 1 : vector<16x256xf32>, vector<16x256xf32>, vector<16x256xf32> -> vector<16x768xf32>
    %c0_22 = arith.constant 0 : index
    %c0_23 = arith.constant 0 : index
    %52 = vector.load %arg3[%c0_22, %c0_23] : memref<768x256xf32, #tpu.memory_space<vmem>>, vector<768x256xf32>
    %cst_24 = arith.constant dense<0.000000e+00> : vector<16x256xf32>
    %53 = tpu.matmul %51, %52, %cst_24 {dimension_numbers = #tpu.dot_dimension_numbers<[1], [0], [0], [1], [0, 0, 1, 1], [], []>} : vector<16x768xf32>, vector<768x256xf32>, vector<16x256xf32> -> vector<16x256xf32>
    %c0_25 = arith.constant 0 : index
    %c0_26 = arith.constant 0 : index
    %54 = vector.load %arg6[%c0_25, %c0_26] : memref<1x256xf32, #tpu.memory_space<vmem>>, vector<1x256xf32>
    %c0_27 = arith.constant 0 : index
    %c0_28 = arith.constant 0 : index
    %55 = vector.load %arg7[%c0_27, %c0_28] : memref<1x256xf32, #tpu.memory_space<vmem>>, vector<1x256xf32>
    %cst_29 = arith.constant dense<0.000000e+00> : vector<256xf32>
    %56 = vector.multi_reduction <add>, %53, %cst_29 [0] : vector<16x256xf32> to vector<256xf32>
    %57 = vector.shape_cast %56 : vector<256xf32> to vector<1x256xf32>
    %58 = arith.mulf %53, %53 : vector<16x256xf32>
    %cst_30 = arith.constant dense<0.000000e+00> : vector<256xf32>
    %59 = vector.multi_reduction <add>, %58, %cst_30 [0] : vector<16x256xf32> to vector<256xf32>
    %60 = vector.shape_cast %59 : vector<256xf32> to vector<1x256xf32>
    %61 = tpu.concatenate %57, %60 in 0 : vector<1x256xf32>, vector<1x256xf32> -> vector<2x256xf32>
    %c0_31 = arith.constant 0 : index
    %c0_32 = arith.constant 0 : index
    %62 = vector.load %arg8[%c0_31, %c0_32] : memref<256x8xf32, #tpu.memory_space<vmem>>, vector<256x8xf32>
    %cst_33 = arith.constant dense<0.000000e+00> : vector<2x8xf32>
    %63 = tpu.matmul %61, %62, %cst_33 {dimension_numbers = #tpu.dot_dimension_numbers<[1], [0], [0], [1], [0, 0, 1, 1], [], []>} : vector<2x256xf32>, vector<256x8xf32>, vector<2x8xf32> -> vector<2x8xf32>
    %cst_34 = arith.constant 5.120000e+02 : f32
    %64 = vector.broadcast %cst_34 : f32 to vector<2x8xf32>
    %65 = arith.divf %63, %64 : vector<2x8xf32>
    %66 = vector.extract_strided_slice %65 {offsets = [0, 0], sizes = [1, 8], strides = [1, 1]} : vector<2x8xf32> to vector<1x8xf32>
    %67 = vector.extract_strided_slice %65 {offsets = [1, 0], sizes = [1, 8], strides = [1, 1]} : vector<2x8xf32> to vector<1x8xf32>
    %68 = arith.mulf %66, %66 : vector<1x8xf32>
    %69 = arith.subf %67, %68 : vector<1x8xf32>
    %cst_35 = arith.constant 0.000000e+00 : f32
    %70 = vector.broadcast %cst_35 : f32 to vector<1x8xf32>
    %71 = arith.maximumf %69, %70 : vector<1x8xf32>
    %72 = tpu.concatenate %66, %71 in 0 : vector<1x8xf32>, vector<1x8xf32> -> vector<2x8xf32>
    %c0_36 = arith.constant 0 : index
    %c0_37 = arith.constant 0 : index
    %73 = vector.load %arg9[%c0_36, %c0_37] : memref<8x256xf32, #tpu.memory_space<vmem>>, vector<8x256xf32>
    %cst_38 = arith.constant dense<0.000000e+00> : vector<2x256xf32>
    %74 = tpu.matmul %72, %73, %cst_38 {dimension_numbers = #tpu.dot_dimension_numbers<[1], [0], [0], [1], [0, 0, 1, 1], [], []>} : vector<2x8xf32>, vector<8x256xf32>, vector<2x256xf32> -> vector<2x256xf32>
    %75 = vector.extract_strided_slice %74 {offsets = [1, 0], sizes = [1, 256], strides = [1, 1]} : vector<2x256xf32> to vector<1x256xf32>
    %cst_39 = arith.constant 9.99999974E-6 : f32
    %76 = vector.broadcast %cst_39 : f32 to vector<1x256xf32>
    %77 = arith.addf %75, %76 : vector<1x256xf32>
    %78 = math.rsqrt %77 : vector<1x256xf32>
    %79 = vector.extract_strided_slice %74 {offsets = [0, 0], sizes = [1, 256], strides = [1, 1]} : vector<2x256xf32> to vector<1x256xf32>
    %80 = vector.broadcast %79 : vector<1x256xf32> to vector<16x256xf32>
    %81 = arith.subf %53, %80 : vector<16x256xf32>
    %82 = vector.broadcast %78 : vector<1x256xf32> to vector<16x256xf32>
    %83 = arith.mulf %81, %82 : vector<16x256xf32>
    %84 = vector.broadcast %54 : vector<1x256xf32> to vector<16x256xf32>
    %85 = arith.mulf %83, %84 : vector<16x256xf32>
    %86 = vector.broadcast %55 : vector<1x256xf32> to vector<16x256xf32>
    %87 = arith.addf %85, %86 : vector<16x256xf32>
    %88 = arith.addf %87, %1 : vector<16x256xf32>
    %cst_40 = arith.constant 0.000000e+00 : f32
    %89 = vector.broadcast %cst_40 : f32 to vector<16x256xf32>
    %90 = arith.maximumf %88, %89 : vector<16x256xf32>
    %c0_41 = arith.constant 0 : index
    %c0_42 = arith.constant 0 : index
    %c0_43 = arith.constant 0 : index
    %91 = vector.load %arg10[%c0_41, %c0_42, %c0_43] : memref<1x16x256xf32, #tpu.memory_space<vmem>>, vector<1x16x256xf32>
    %92 = vector.shape_cast %91 : vector<1x16x256xf32> to vector<16x256xf32>
    %93 = vector.shape_cast %90 : vector<16x256xf32> to vector<1x16x256xf32>
    tpu.vector_store %arg10[%c0_41, %c0_42, %c0_43], %93 {strides = array<i32>} : memref<1x16x256xf32, #tpu.memory_space<vmem>>, vector<1x16x256xf32>,
    return
  }
  func.func @transform_0(%arg0: i32) -> (i32, i32, i32) {
    %c0_i32 = arith.constant 0 : i32
    %c0_i32_0 = arith.constant 0 : i32
    %c0_i32_1 = arith.constant 0 : i32
    return %arg0, %c0_i32, %c0_i32_0 : i32, i32, i32
  }
  func.func @transform_1(%arg0: i32) -> (i32, i32) {
    %c0_i32 = arith.constant 0 : i32
    %c0_i32_0 = arith.constant 0 : i32
    %c0_i32_1 = arith.constant 0 : i32
    return %c0_i32, %c0_i32_0 : i32, i32
  }
  func.func @transform_2(%arg0: i32) -> (i32, i32) {
    %c0_i32 = arith.constant 0 : i32
    %c0_i32_0 = arith.constant 0 : i32
    %c0_i32_1 = arith.constant 0 : i32
    return %c0_i32, %c0_i32_0 : i32, i32
  }
  func.func @transform_3(%arg0: i32) -> (i32, i32) {
    %c0_i32 = arith.constant 0 : i32
    %c0_i32_0 = arith.constant 0 : i32
    %c0_i32_1 = arith.constant 0 : i32
    return %c0_i32, %c0_i32_0 : i32, i32
  }
  func.func @transform_4(%arg0: i32) -> (i32, i32) {
    %c0_i32 = arith.constant 0 : i32
    %c0_i32_0 = arith.constant 0 : i32
    %c0_i32_1 = arith.constant 0 : i32
    return %c0_i32, %c0_i32_0 : i32, i32
  }
  func.func @transform_5(%arg0: i32) -> (i32, i32) {
    %c0_i32 = arith.constant 0 : i32
    %c0_i32_0 = arith.constant 0 : i32
    %c0_i32_1 = arith.constant 0 : i32
    return %c0_i32, %c0_i32_0 : i32, i32
  }
  func.func @transform_6(%arg0: i32) -> (i32, i32) {
    %c0_i32 = arith.constant 0 : i32
    %c0_i32_0 = arith.constant 0 : i32
    %c0_i32_1 = arith.constant 0 : i32
    return %c0_i32, %c0_i32_0 : i32, i32
  }
  func.func @transform_7(%arg0: i32) -> (i32, i32) {
    %c0_i32 = arith.constant 0 : i32
    %c0_i32_0 = arith.constant 0 : i32
    %c0_i32_1 = arith.constant 0 : i32
    return %c0_i32, %c0_i32_0 : i32, i32
  }
  func.func @transform_8(%arg0: i32) -> (i32, i32) {
    %c0_i32 = arith.constant 0 : i32
    %c0_i32_0 = arith.constant 0 : i32
    %c0_i32_1 = arith.constant 0 : i32
    return %c0_i32, %c0_i32_0 : i32, i32
  }
  func.func @transform_9(%arg0: i32) -> (i32, i32, i32) {
    %c0_i32 = arith.constant 0 : i32
    %c0_i32_0 = arith.constant 0 : i32
    %c0_i32_1 = arith.constant 0 : i32
    return %arg0, %c0_i32, %c0_i32_0 : i32, i32, i32
  }
}

</mosaic_0001>

<llo_original>
// kernel: tpu_custom_call.1
$region0: #{tpu_custom_call.1}
  #allocation0 [shape = 'u32[]', space=smem, size = 0x4, offset = 0x4, fixed_abs, tag = 'smem constant byte address 0x4 - core index']
  #allocation1 [shape = 'u32[144,128]{1,0:T(1,128)}', space=vmem, size = 0x12000, scoped, tag = 'internal scratch']
  %s0 = inlined_call_operand.vmem [shape: f32[2,16,256], index: 0, kind: input, shape index: {}]
  %s1 = inlined_call_operand.hbm [shape: f32[768,256], index: 1, kind: input, shape index: {}]
  %s2 = inlined_call_operand.hbm [shape: f32[768,256], index: 2, kind: input, shape index: {}]
  %s3 = inlined_call_operand.vmem [shape: f32[1,256], index: 3, kind: input, shape index: {}]
  %s4 = inlined_call_operand.vmem [shape: f32[1,256], index: 4, kind: input, shape index: {}]
  %s5 = inlined_call_operand.vmem [shape: f32[1,256], index: 5, kind: input, shape index: {}]
  %s6 = inlined_call_operand.vmem [shape: f32[1,256], index: 6, kind: input, shape index: {}]
  %s7 = inlined_call_operand.vmem [shape: f32[256,8], index: 7, kind: input, shape index: {}]
  %s8 = inlined_call_operand.vmem [shape: f32[8,256], index: 8, kind: input, shape index: {}]
  %s9 = inlined_call_operand.hbm [shape: f32[2,16,256], index: 9, kind: output, shape index: {}]
  %s10 = sld [smem:[#allocation0]]
  $region77: #{tpu_custom_call.1} parent=0
    _
  %s12 = ssub.s32 1, %s10
  %s13 = scalar_select 0, %s12, %s10
  $region1: #{tpu_custom_call.1} parent=0
    #allocation2 [shape = 'u8[786432]{0}', space=vmem, size = 0xc0000, scoped, tag = 'input window, operand 1, single buffered']
    #allocation3 [shape = 's32[2]{0}', space=sflag, size = 0x8, scoped, tag = 'scoped memory for tpu_custom_call.1']
    #allocation4 [shape = 's32[2]{0}', space=sflag, size = 0x8, scoped, tag = 'scoped memory for tpu_custom_call.1']
    #allocation5 [shape = 'u8[786432]{0}', space=vmem, size = 0xc0000, scoped, tag = 'input window, operand 2, single buffered']
    #allocation6 [shape = 's32[1]{0}', space=sflag, size = 0x4, scoped, tag = 'scoped memory for tpu_custom_call.1']
    #allocation7 [shape = 'u8[32768]{0}', space=vmem, size = 0x8000, scoped, tag = 'output window, operand 0']
    %14 = vsyncpa [#allocation3], 0
    %15 = vsyncpa [#allocation6], 0
    %16 = vsyncpa [#allocation4], 0
    %s17 = scalar_lea.sflag [#allocation4], 1
    %18 = vsyncpa %s17, 0
    loop: start=0, step=1, limit=4
    $region2: #{tpu_custom_call.1} parent=1 // loop_pre_header
      _
    $region3: #{tpu_custom_call.1} parent=1 // loop_header
      %s20 = sphi 0, %s24
      %p21 = scmp.ge.s32.totalorder %s20, 4
      %s30 = sphi 0, %s32
      %s33 = sphi 0, %s30
      %s34 = sphi 0, %s33
      %s50 = sphi 0, %s34
      %s54 = sphi 0, %s54
      %s56 = sphi 0, %s54
      %s57 = sphi 0, %s56
      %s71 = sphi 0, %s57
      %s75 = sphi 0, %s75
      %s77 = sphi 0, %s75
      %s78 = sphi 0, %s77
      %s92 = sphi 0, %s78
      %s96 = sphi 0, %s96
      %s98 = sphi 0, %s96
      %s99 = sphi 0, %s98
      %s113 = sphi 0, %s99
      %s117 = sphi 0, %s117
      %s119 = sphi 0, %s117
      %s120 = sphi 0, %s119
      %s134 = sphi 0, %s120
      %s138 = sphi 0, %s138
      %s140 = sphi 0, %s138
      %s141 = sphi 0, %s140
      %s155 = sphi 0, %s141
      %s159 = sphi 0, %s159
      %s161 = sphi 0, %s159
      %s162 = sphi 0, %s161
      %s176 = sphi 0, %s162
      %s180 = sphi 0, %s180
      %s182 = sphi 0, %s180
      %s183 = sphi 0, %s182
      %s197 = sphi 0, %s183
      %s201 = sphi 0, %s201
      %s203 = sphi 0, %s201
      %s204 = sphi 0, %s203
      %s218 = sphi 0, %s204
      %s224 = sphi 0, %s226
      %s227 = sphi 0, %s224
      %s228 = sphi 0, %s227
      %s244 = sphi 0, %s228
    $region4: #{tpu_custom_call.1} parent=1 // loop_header_branch
      %23 = sbr.rel (%p21) target = $region8
    $region5: #{tpu_custom_call.1} parent=1 // loop_body
      %s25 = ssub.s32 %s20, 1
      %s26 = ssub.s32 %s20, 2
      %s27 = sadd.s32 %s20, 1
      %s28 = ssub.s32 %s20, %s27
      %p29 = scmp.eq.s32.totalorder %s28, 0
      %s31 = sadd.s32 %s30, 1
      %s32 = scalar_select %p29, %s30, %s31
      %p35 = pneg %p29
      %p36 = scmp.eq.s32.totalorder %s20, 1
      %p37 = por %p35, %p36
      %p38 = scmp.ne.s32.totalorder %s30, %s33
      %p39 = scmp.eq.s32.totalorder %s20, 0
      %p40 = por %p38, %p39
      %p41 = scmp.ne.s32.totalorder %s30, %s33
      %p42 = scmp.eq.s32.totalorder %s25, 1
      %p43 = por %p41, %p42
      %p44 = scmp.ne.s32.totalorder %s33, %s34
      %p45 = scmp.eq.s32.totalorder %s25, 0
      %p46 = por %p44, %p45
      %p47 = scmp.ne.s32.totalorder %s33, %s34
      %p48 = scmp.eq.s32.totalorder %s26, 1
      %p49 = por %p47, %p48
      %p51 = scmp.ne.s32.totalorder %s34, %s50
      %p52 = scmp.eq.s32.totalorder %s26, 0
      %p53 = por %p51, %p52
      %s55 = sadd.s32 %s54, 1
      %p58 = scmp.eq.s32.totalorder %s20, 1
      %p59 = scmp.ne.s32.totalorder %s54, %s56
      %p60 = scmp.eq.s32.totalorder %s20, 0
      %p61 = por %p59, %p60
      %p62 = scmp.ne.s32.totalorder %s54, %s56
      %p63 = scmp.eq.s32.totalorder %s25, 1
      %p64 = por %p62, %p63
      %p65 = scmp.ne.s32.totalorder %s56, %s57
      %p66 = scmp.eq.s32.totalorder %s25, 0
      %p67 = por %p65, %p66
      %p68 = scmp.ne.s32.totalorder %s56, %s57
      %p69 = scmp.eq.s32.totalorder %s26, 1
      %p70 = por %p68, %p69
      %p72 = scmp.ne.s32.totalorder %s57, %s71
      %p73 = scmp.eq.s32.totalorder %s26, 0
      %p74 = por %p72, %p73
      %s76 = sadd.s32 %s75, 1
      %p79 = scmp.eq.s32.totalorder %s20, 1
      %p80 = scmp.ne.s32.totalorder %s75, %s77
      %p81 = scmp.eq.s32.totalorder %s20, 0
      %p82 = por %p80, %p81
      %p83 = scmp.ne.s32.totalorder %s75, %s77
      %p84 = scmp.eq.s32.totalorder %s25, 1
      %p85 = por %p83, %p84
      %p86 = scmp.ne.s32.totalorder %s77, %s78
      %p87 = scmp.eq.s32.totalorder %s25, 0
      %p88 = por %p86, %p87
      %p89 = scmp.ne.s32.totalorder %s77, %s78
      %p90 = scmp.eq.s32.totalorder %s26, 1
      %p91 = por %p89, %p90
      %p93 = scmp.ne.s32.totalorder %s78, %s92
      %p94 = scmp.eq.s32.totalorder %s26, 0
      %p95 = por %p93, %p94
      %s97 = sadd.s32 %s96, 1
      %p100 = scmp.eq.s32.totalorder %s20, 1
      %p101 = scmp.ne.s32.totalorder %s96, %s98
      %p102 = scmp.eq.s32.totalorder %s20, 0
      %p103 = por %p101, %p102
      %p104 = scmp.ne.s32.totalorder %s96, %s98
      %p105 = scmp.eq.s32.totalorder %s25, 1
      %p106 = por %p104, %p105
      %p107 = scmp.ne.s32.totalorder %s98, %s99
      %p108 = scmp.eq.s32.totalorder %s25, 0
      %p109 = por %p107, %p108
      %p110 = scmp.ne.s32.totalorder %s98, %s99
      %p111 = scmp.eq.s32.totalorder %s26, 1
      %p112 = por %p110, %p111
      %p114 = scmp.ne.s32.totalorder %s99, %s113
      %p115 = scmp.eq.s32.totalorder %s26, 0
      %p116 = por %p114, %p115
      %s118 = sadd.s32 %s117, 1
      %p121 = scmp.eq.s32.totalorder %s20, 1
      %p122 = scmp.ne.s32.totalorder %s117, %s119
      %p123 = scmp.eq.s32.totalorder %s20, 0
      %p124 = por %p122, %p123
      %p125 = scmp.ne.s32.totalorder %s117, %s119
      %p126 = scmp.eq.s32.totalorder %s25, 1
      %p127 = por %p125, %p126
      %p128 = scmp.ne.s32.totalorder %s119, %s120
      %p129 = scmp.eq.s32.totalorder %s25, 0
      %p130 = por %p128, %p129
      %p131 = scmp.ne.s32.totalorder %s119, %s120
      %p132 = scmp.eq.s32.totalorder %s26, 1
      %p133 = por %p131, %p132
      %p135 = scmp.ne.s32.totalorder %s120, %s134
      %p136 = scmp.eq.s32.totalorder %s26, 0
      %p137 = por %p135, %p136
      %s139 = sadd.s32 %s138, 1
      %p142 = scmp.eq.s32.totalorder %s20, 1
      %p143 = scmp.ne.s32.totalorder %s138, %s140
      %p144 = scmp.eq.s32.totalorder %s20, 0
      %p145 = por %p143, %p144
      %p146 = scmp.ne.s32.totalorder %s138, %s140
      %p147 = scmp.eq.s32.totalorder %s25, 1
      %p148 = por %p146, %p147
      %p149 = scmp.ne.s32.totalorder %s140, %s141
      %p150 = scmp.eq.s32.totalorder %s25, 0
      %p151 = por %p149, %p150
      %p152 = scmp.ne.s32.totalorder %s140, %s141
      %p153 = scmp.eq.s32.totalorder %s26, 1
      %p154 = por %p152, %p153
      %p156 = scmp.ne.s32.totalorder %s141, %s155
      %p157 = scmp.eq.s32.totalorder %s26, 0
      %p158 = por %p156, %p157
      %s160 = sadd.s32 %s159, 1
      %p163 = scmp.eq.s32.totalorder %s20, 1
      %p164 = scmp.ne.s32.totalorder %s159, %s161
      %p165 = scmp.eq.s32.totalorder %s20, 0
      %p166 = por %p164, %p165
      %p167 = scmp.ne.s32.totalorder %s159, %s161
      %p168 = scmp.eq.s32.totalorder %s25, 1
      %p169 = por %p167, %p168
      %p170 = scmp.ne.s32.totalorder %s161, %s162
      %p171 = scmp.eq.s32.totalorder %s25, 0
      %p172 = por %p170, %p171
      %p173 = scmp.ne.s32.totalorder %s161, %s162
      %p174 = scmp.eq.s32.totalorder %s26, 1
      %p175 = por %p173, %p174
      %p177 = scmp.ne.s32.totalorder %s162, %s176
      %p178 = scmp.eq.s32.totalorder %s26, 0
      %p179 = por %p177, %p178
      %s181 = sadd.s32 %s180, 1
      %p184 = scmp.eq.s32.totalorder %s20, 1
      %p185 = scmp.ne.s32.totalorder %s180, %s182
      %p186 = scmp.eq.s32.totalorder %s20, 0
      %p187 = por %p185, %p186
      %p188 = scmp.ne.s32.totalorder %s180, %s182
      %p189 = scmp.eq.s32.totalorder %s25, 1
      %p190 = por %p188, %p189
      %p191 = scmp.ne.s32.totalorder %s182, %s183
      %p192 = scmp.eq.s32.totalorder %s25, 0
      %p193 = por %p191, %p192
      %p194 = scmp.ne.s32.totalorder %s182, %s183
      %p195 = scmp.eq.s32.totalorder %s26, 1
      %p196 = por %p194, %p195
      %p198 = scmp.ne.s32.totalorder %s183, %s197
      %p199 = scmp.eq.s32.totalorder %s26, 0
      %p200 = por %p198, %p199
      %s202 = sadd.s32 %s201, 1
      %p205 = scmp.eq.s32.totalorder %s20, 1
      %p206 = scmp.ne.s32.totalorder %s201, %s203
      %p207 = scmp.eq.s32.totalorder %s20, 0
      %p208 = por %p206, %p207
      %p209 = scmp.ne.s32.totalorder %s201, %s203
      %p210 = scmp.eq.s32.totalorder %s25, 1
      %p211 = por %p209, %p210
      %p212 = scmp.ne.s32.totalorder %s203, %s204
      %p213 = scmp.eq.s32.totalorder %s25, 0
      %p214 = por %p212, %p213
      %p215 = scmp.ne.s32.totalorder %s203, %s204
      %p216 = scmp.eq.s32.totalorder %s26, 1
      %p217 = por %p215, %p216
      %p219 = scmp.ne.s32.totalorder %s204, %s218
      %p220 = scmp.eq.s32.totalorder %s26, 0
      %p221 = por %p219, %p220
      %s222 = ssub.s32 %s20, %s27
      %p223 = scmp.eq.s32.totalorder %s222, 0
      %s225 = sadd.s32 %s224, 1
      %s226 = scalar_select %p223, %s224, %s225
      %p229 = pneg %p223
      %p230 = scmp.eq.s32.totalorder %s20, 1
      %p231 = por %p229, %p230
      %p232 = scmp.ne.s32.totalorder %s224, %s227
      %p233 = scmp.eq.s32.totalorder %s20, 0
      %p234 = por %p232, %p233
      %p235 = scmp.ne.s32.totalorder %s224, %s227
      %p236 = scmp.eq.s32.totalorder %s25, 1
      %p237 = por %p235, %p236
      %p238 = scmp.ne.s32.totalorder %s227, %s228
      %p239 = scmp.eq.s32.totalorder %s25, 0
      %p240 = por %p238, %p239
      %p241 = scmp.ne.s32.totalorder %s227, %s228
      %p242 = scmp.eq.s32.totalorder %s26, 1
      %p243 = por %p241, %p242
      %p245 = scmp.ne.s32.totalorder %s228, %s244
      %p246 = scmp.eq.s32.totalorder %s26, 0
      %p247 = por %p245, %p246
      %p248 = scmp.le.s32.totalorder 1, %s20
      %p249 = scmp.lt.s32.totalorder %s20, 3
      %p250 = pnand %p248, %p249
      %p251 = pneg %p250
      // Predicated region
      $region9: #{tpu_custom_call.1} parent=5 // pred_check
        _
      $region10: #{tpu_custom_call.1} parent=5 // pred_check_branch
        %253 = sbr.rel (%p250) target = $region12
      $region11: #{tpu_custom_call.1} parent=5 // pred_region
        %s254 = ssub.s32 %s20, 1
        // Predicated region
        $region13: #{tpu_custom_call.1} parent=11 // pred_check
          %p255 = pneg %p67
        $region14: #{tpu_custom_call.1} parent=11 // pred_check_branch
          %257 = sbr.rel (%p255) target = $region16
        $region15: #{tpu_custom_call.1} parent=11 // pred_region
          %s259 = ssub.s32 24576, 24576
          %260 = vsyncadd [#allocation3], %s259
          %s261 = sshll.u32 [#allocation2], 4
          %s262 = int_to_ptr.vmem [resolvable:$true] %s261
          %267 = dma.hbm_to_vmem [thread:$0]  %s1, 24576, %s262, [#allocation3], 256, 256, 16
        $region16: #{tpu_custom_call.1} parent=11 // pred_fallthru
          _
        // Predicated region
        $region17: #{tpu_custom_call.1} parent=11 // pred_check
          %p268 = pneg %p88
        $region18: #{tpu_custom_call.1} parent=11 // pred_check_branch
          %270 = sbr.rel (%p268) target = $region20
        $region19: #{tpu_custom_call.1} parent=11 // pred_region
          %s272 = ssub.s32 24576, 24576
          %273 = vsyncadd [#allocation6], %s272
          %s274 = sshll.u32 [#allocation5], 4
          %s275 = int_to_ptr.vmem [resolvable:$true] %s274
          %280 = dma.hbm_to_vmem [thread:$0]  %s2, 24576, %s275, [#allocation6], 256, 256, 16
        $region20: #{tpu_custom_call.1} parent=11 // pred_fallthru
          _
        // Predicated region
        $region21: #{tpu_custom_call.1} parent=11 // pred_check
          %p281 = pneg %p109
        $region22: #{tpu_custom_call.1} parent=11 // pred_check_branch
          %283 = sbr.rel (%p281) target = $region24
        $region23: #{tpu_custom_call.1} parent=11 // pred_region
          _
        $region24: #{tpu_custom_call.1} parent=11 // pred_fallthru
          _
        // Predicated region
        $region25: #{tpu_custom_call.1} parent=11 // pred_check
          %p284 = pneg %p130
        $region26: #{tpu_custom_call.1} parent=11 // pred_check_branch
          %286 = sbr.rel (%p284) target = $region28
        $region27: #{tpu_custom_call.1} parent=11 // pred_region
          _
        $region28: #{tpu_custom_call.1} parent=11 // pred_fallthru
          _
        // Predicated region
        $region29: #{tpu_custom_call.1} parent=11 // pred_check
          %p287 = pneg %p151
        $region30: #{tpu_custom_call.1} parent=11 // pred_check_branch
          %289 = sbr.rel (%p287) target = $region32
        $region31: #{tpu_custom_call.1} parent=11 // pred_region
          _
        $region32: #{tpu_custom_call.1} parent=11 // pred_fallthru
          _
        // Predicated region
        $region33: #{tpu_custom_call.1} parent=11 // pred_check
          %p290 = pneg %p172
        $region34: #{tpu_custom_call.1} parent=11 // pred_check_branch
          %292 = sbr.rel (%p290) target = $region36
        $region35: #{tpu_custom_call.1} parent=11 // pred_region
          _
        $region36: #{tpu_custom_call.1} parent=11 // pred_fallthru
          _
        // Predicated region
        $region37: #{tpu_custom_call.1} parent=11 // pred_check
          %p293 = pneg %p193
        $region38: #{tpu_custom_call.1} parent=11 // pred_check_branch
          %295 = sbr.rel (%p293) target = $region40
        $region39: #{tpu_custom_call.1} parent=11 // pred_region
          _
        $region40: #{tpu_custom_call.1} parent=11 // pred_fallthru
          _
        // Predicated region
        $region41: #{tpu_custom_call.1} parent=11 // pred_check
          %p296 = pneg %p214
        $region42: #{tpu_custom_call.1} parent=11 // pred_check_branch
          %298 = sbr.rel (%p296) target = $region44
        $region43: #{tpu_custom_call.1} parent=11 // pred_region
          _
        $region44: #{tpu_custom_call.1} parent=11 // pred_fallthru
          _
      $region12: #{tpu_custom_call.1} parent=5 // pred_fallthru
        _
      %p299 = scmp.lt.s32.totalorder %s20, 2
      // Predicated region
      $region45: #{tpu_custom_call.1} parent=5 // pred_check
        %p300 = pneg %p299
      $region46: #{tpu_custom_call.1} parent=5 // pred_check_branch
        %302 = sbr.rel (%p300) target = $region48
      $region47: #{tpu_custom_call.1} parent=5 // pred_region
        // Predicated region
        $region49: #{tpu_custom_call.1} parent=47 // pred_check
          %p303 = pneg %p40
        $region50: #{tpu_custom_call.1} parent=47 // pred_check_branch
          %305 = sbr.rel (%p303) target = $region52
        $region51: #{tpu_custom_call.1} parent=47 // pred_region
          %p306 = scmp.lt.s32.totalorder %s20, 1
          %s307 = scalar_select %p306, %s20, 1
          %s308 = smul.addr %s307, 4
          %s309 = smul.addr %s308, 8
          %s310 = scalar_lea.vmem %s0, %s309
        $region52: #{tpu_custom_call.1} parent=47 // pred_fallthru
          _
      $region48: #{tpu_custom_call.1} parent=5 // pred_fallthru
        _
      %p311 = scmp.le.s32.totalorder 1, %s20
      %p312 = scmp.lt.s32.totalorder %s20, 3
      %p313 = pnand %p311, %p312
      %p314 = pneg %p313
      // Predicated region
      $region53: #{tpu_custom_call.1} parent=5 // pred_check
        _
      $region54: #{tpu_custom_call.1} parent=5 // pred_check_branch
        %316 = sbr.rel (%p313) target = $region56
      $region55: #{tpu_custom_call.1} parent=5 // pred_region
        %s317 = ssub.s32 %s20, 1
        // Predicated region
        $region57: #{tpu_custom_call.1} parent=55 // pred_check
          %p318 = pneg %p67
        $region58: #{tpu_custom_call.1} parent=55 // pred_check_branch
          %320 = sbr.rel (%p318) target = $region60
        $region59: #{tpu_custom_call.1} parent=55 // pred_region
          %321 = dma.done [#allocation3], 24576
        $region60: #{tpu_custom_call.1} parent=55 // pred_fallthru
          _
        // Predicated region
        $region61: #{tpu_custom_call.1} parent=55 // pred_check
          %p322 = pneg %p88
        $region62: #{tpu_custom_call.1} parent=55 // pred_check_branch
          %324 = sbr.rel (%p322) target = $region64
        $region63: #{tpu_custom_call.1} parent=55 // pred_region
          %325 = dma.done [#allocation6], 24576
        $region64: #{tpu_custom_call.1} parent=55 // pred_fallthru
          _
        %p326 = scmp.lt.s32.totalorder %s25, 1
        %s327 = scalar_select %p326, %s25, 1
        %s328 = smul.addr %s327, 4
        %s329 = smul.addr %s328, 8
        %s330 = scalar_lea.vmem %s0, %s329
        %p331 = pneg %p46
        %p332 = pneg %p43
        %p333 = pneg %p67
        %p334 = pneg %p64
        %p335 = pneg %p88
        %p336 = pneg %p85
        %p337 = pneg %p109
        %p338 = pneg %p106
        %p339 = pneg %p130
        %p340 = pneg %p127
        %p341 = pneg %p151
        %p342 = pneg %p148
        %p343 = pneg %p172
        %p344 = pneg %p169
        %p345 = pneg %p193
        %p346 = pneg %p190
        %p347 = pneg %p214
        %p348 = pneg %p211
        %p349 = pneg %p240
        %p350 = pneg %p237
        %s351 = sand.u32 %s227, 1
        %s352 = scalar_lea.sflag [#allocation4], %s351
        %s353 = sand.u32 %s227, 1
        %s354 = smul.addr %s353, 32
        %s355 = scalar_lea.vmem [#allocation7], %s354
        %p356 = scmp.lt.s32.totalorder %s25, 1
        %s357 = scalar_select %p356, %s25, 1
        %s358 = smul.addr %s357, 4
        %s359 = smul.addr %s358, 8
        %s360 = scalar_lea.vmem %s0, %s359
        %v361 = vld [vmem:[%s360] sm:$0xff]
        %v362 = vld [vmem:[%s360 + $0x8] sm:$0xff]
        %v363 = vld [vmem:[%s360 + $0x10] sm:$0xff]
        %v364 = vld [vmem:[%s360 + $0x18] sm:$0xff]
        %vm369 = vcmask 1040384
        %v370 = vrot.slane %v361, 7
        %v371 = vrot.slane %v362, 7
        %v372 = vrot.slane %v363, 7
        %v373 = vsel %vm369, %v370, %v372
        %v374 = vrot.slane %v364, 7
        %v375 = vsel %vm369, %v371, %v374
        %v380 = vsel %vm369, 0.0, %v370
        %v381 = vsel %vm369, 0.0, %v371
        %vm382 = vcmask 1046528
        %v383 = vrot.slane %v361, 1
        %v384 = vrot.slane %v363, 1
        %v385 = vsel %vm382, %v383, %v384
        %v386 = vrot.slane %v362, 1
        %v387 = vrot.slane %v364, 1
        %v388 = vsel %vm382, %v386, %v387
        %v393 = vsel %vm382, %v384, 0.0
        %v394 = vsel %vm382, %v387, 0.0
        %v395 = vld [vmem:[#allocation2] sm:$0xff]
        %v396 = vld [vmem:[#allocation2 + $0x8] sm:$0xff]
        %v397 = vld [vmem:[#allocation2 + $0x10] sm:$0xff]
        %v398 = vld [vmem:[#allocation2 + $0x18] sm:$0xff]
        %v399 = vld [vmem:[#allocation2 + $0x20] sm:$0xff]
        %v400 = vld [vmem:[#allocation2 + $0x28] sm:$0xff]
        %v401 = vld [vmem:[#allocation2 + $0x30] sm:$0xff]
        %v402 = vld [vmem:[#allocation2 + $0x38] sm:$0xff]
        %v403 = vld [vmem:[#allocation2 + $0x40] sm:$0xff]
        %v404 = vld [vmem:[#allocation2 + $0x48] sm:$0xff]
        %v405 = vld [vmem:[#allocation2 + $0x50] sm:$0xff]
        %v406 = vld [vmem:[#allocation2 + $0x58] sm:$0xff]
        %v407 = vld [vmem:[#allocation2 + $0x60] sm:$0xff]
        %v408 = vld [vmem:[#allocation2 + $0x68] sm:$0xff]
        %v409 = vld [vmem:[#allocation2 + $0x70] sm:$0xff]
        %v410 = vld [vmem:[#allocation2 + $0x78] sm:$0xff]
        %v411 = vld [vmem:[#allocation2 + $0x80] sm:$0xff]
        %v412 = vld [vmem:[#allocation2 + $0x88] sm:$0xff]
        %v413 = vld [vmem:[#allocation2 + $0x90] sm:$0xff]
        %v414 = vld [vmem:[#allocation2 + $0x98] sm:$0xff]
        %v415 = vld [vmem:[#allocation2 + $0xa0] sm:$0xff]
        %v416 = vld [vmem:[#allocation2 + $0xa8] sm:$0xff]
        %v417 = vld [vmem:[#allocation2 + $0xb0] sm:$0xff]
        %v418 = vld [vmem:[#allocation2 + $0xb8] sm:$0xff]
        %v419 = vld [vmem:[#allocation2 + $0xc0] sm:$0xff]
        %v420 = vld [vmem:[#allocation2 + $0xc8] sm:$0xff]
        %v421 = vld [vmem:[#allocation2 + $0xd0] sm:$0xff]
        %v422 = vld [vmem:[#allocation2 + $0xd8] sm:$0xff]
        %v423 = vld [vmem:[#allocation2 + $0xe0] sm:$0xff]
        %v424 = vld [vmem:[#allocation2 + $0xe8] sm:$0xff]
        %v425 = vld [vmem:[#allocation2 + $0xf0] sm:$0xff]
        %v426 = vld [vmem:[#allocation2 + $0xf8] sm:$0xff]
        %v427 = vld [vmem:[#allocation2 + $0x100] sm:$0xff]
        %v428 = vld [vmem:[#allocation2 + $0x108] sm:$0xff]
        %v429 = vld [vmem:[#allocation2 + $0x110] sm:$0xff]
        %v430 = vld [vmem:[#allocation2 + $0x118] sm:$0xff]
        %v431 = vld [vmem:[#allocation2 + $0x120] sm:$0xff]
        %v432 = vld [vmem:[#allocation2 + $0x128] sm:$0xff]
        %v433 = vld [vmem:[#allocation2 + $0x130] sm:$0xff]
        %v434 = vld [vmem:[#allocation2 + $0x138] sm:$0xff]
        %v435 = vld [vmem:[#allocation2 + $0x140] sm:$0xff]
        %v436 = vld [vmem:[#allocation2 + $0x148] sm:$0xff]
        %v437 = vld [vmem:[#allocation2 + $0x150] sm:$0xff]
        %v438 = vld [vmem:[#allocation2 + $0x158] sm:$0xff]
        %v439 = vld [vmem:[#allocation2 + $0x160] sm:$0xff]
        %v440 = vld [vmem:[#allocation2 + $0x168] sm:$0xff]
        %v441 = vld [vmem:[#allocation2 + $0x170] sm:$0xff]
        %v442 = vld [vmem:[#allocation2 + $0x178] sm:$0xff]
        %v443 = vld [vmem:[#allocation2 + $0x180] sm:$0xff]
        %v444 = vld [vmem:[#allocation2 + $0x188] sm:$0xff]
        %v445 = vld [vmem:[#allocation2 + $0x190] sm:$0xff]
        %v446 = vld [vmem:[#allocation2 + $0x198] sm:$0xff]
        %v447 = vld [vmem:[#allocation2 + $0x1a0] sm:$0xff]
        %v448 = vld [vmem:[#allocation2 + $0x1a8] sm:$0xff]
        %v449 = vld [vmem:[#allocation2 + $0x1b0] sm:$0xff]
        %v450 = vld [vmem:[#allocation2 + $0x1b8] sm:$0xff]
        %v451 = vld [vmem:[#allocation2 + $0x1c0] sm:$0xff]
        %v452 = vld [vmem:[#allocation2 + $0x1c8] sm:$0xff]
        %v453 = vld [vmem:[#allocation2 + $0x1d0] sm:$0xff]
        %v454 = vld [vmem:[#allocation2 + $0x1d8] sm:$0xff]
        %v455 = vld [vmem:[#allocation2 + $0x1e0] sm:$0xff]
        %v456 = vld [vmem:[#allocation2 + $0x1e8] sm:$0xff]
        %v457 = vld [vmem:[#allocation2 + $0x1f0] sm:$0xff]
        %v458 = vld [vmem:[#allocation2 + $0x1f8] sm:$0xff]
        %v459 = vld [vmem:[#allocation2 + $0x200] sm:$0xff]
        %v460 = vld [vmem:[#allocation2 + $0x208] sm:$0xff]
        %v461 = vld [vmem:[#allocation2 + $0x210] sm:$0xff]
        %v462 = vld [vmem:[#allocation2 + $0x218] sm:$0xff]
        %v463 = vld [vmem:[#allocation2 + $0x220] sm:$0xff]
        %v464 = vld [vmem:[#allocation2 + $0x228] sm:$0xff]
        %v465 = vld [vmem:[#allocation2 + $0x230] sm:$0xff]
        %v466 = vld [vmem:[#allocation2 + $0x238] sm:$0xff]
        %v467 = vld [vmem:[#allocation2 + $0x240] sm:$0xff]
        %v468 = vld [vmem:[#allocation2 + $0x248] sm:$0xff]
        %v469 = vld [vmem:[#allocation2 + $0x250] sm:$0xff]
        %v470 = vld [vmem:[#allocation2 + $0x258] sm:$0xff]
        %v471 = vld [vmem:[#allocation2 + $0x260] sm:$0xff]
        %v472 = vld [vmem:[#allocation2 + $0x268] sm:$0xff]
        %v473 = vld [vmem:[#allocation2 + $0x270] sm:$0xff]
        %v474 = vld [vmem:[#allocation2 + $0x278] sm:$0xff]
        %v475 = vld [vmem:[#allocation2 + $0x280] sm:$0xff]
        %v476 = vld [vmem:[#allocation2 + $0x288] sm:$0xff]
        %v477 = vld [vmem:[#allocation2 + $0x290] sm:$0xff]
        %v478 = vld [vmem:[#allocation2 + $0x298] sm:$0xff]
        %v479 = vld [vmem:[#allocation2 + $0x2a0] sm:$0xff]
        %v480 = vld [vmem:[#allocation2 + $0x2a8] sm:$0xff]
        %v481 = vld [vmem:[#allocation2 + $0x2b0] sm:$0xff]
        %v482 = vld [vmem:[#allocation2 + $0x2b8] sm:$0xff]
        %v483 = vld [vmem:[#allocation2 + $0x2c0] sm:$0xff]
        %v484 = vld [vmem:[#allocation2 + $0x2c8] sm:$0xff]
        %v485 = vld [vmem:[#allocation2 + $0x2d0] sm:$0xff]
        %v486 = vld [vmem:[#allocation2 + $0x2d8] sm:$0xff]
        %v487 = vld [vmem:[#allocation2 + $0x2e0] sm:$0xff]
        %v488 = vld [vmem:[#allocation2 + $0x2e8] sm:$0xff]
        %v489 = vld [vmem:[#allocation2 + $0x2f0] sm:$0xff]
        %v490 = vld [vmem:[#allocation2 + $0x2f8] sm:$0xff]
        %v491 = vld [vmem:[#allocation2 + $0x300] sm:$0xff]
        %v492 = vld [vmem:[#allocation2 + $0x308] sm:$0xff]
        %v493 = vld [vmem:[#allocation2 + $0x310] sm:$0xff]
        %v494 = vld [vmem:[#allocation2 + $0x318] sm:$0xff]
        %v495 = vld [vmem:[#allocation2 + $0x320] sm:$0xff]
        %v496 = vld [vmem:[#allocation2 + $0x328] sm:$0xff]
        %v497 = vld [vmem:[#allocation2 + $0x330] sm:$0xff]
        %v498 = vld [vmem:[#allocation2 + $0x338] sm:$0xff]
        %v499 = vld [vmem:[#allocation2 + $0x340] sm:$0xff]
        %v500 = vld [vmem:[#allocation2 + $0x348] sm:$0xff]
        %v501 = vld [vmem:[#allocation2 + $0x350] sm:$0xff]
        %v502 = vld [vmem:[#allocation2 + $0x358] sm:$0xff]
        %v503 = vld [vmem:[#allocation2 + $0x360] sm:$0xff]
        %v504 = vld [vmem:[#allocation2 + $0x368] sm:$0xff]
        %v505 = vld [vmem:[#allocation2 + $0x370] sm:$0xff]
        %v506 = vld [vmem:[#allocation2 + $0x378] sm:$0xff]
        %v507 = vld [vmem:[#allocation2 + $0x380] sm:$0xff]
        %v508 = vld [vmem:[#allocation2 + $0x388] sm:$0xff]
        %v509 = vld [vmem:[#allocation2 + $0x390] sm:$0xff]
        %v510 = vld [vmem:[#allocation2 + $0x398] sm:$0xff]
        %v511 = vld [vmem:[#allocation2 + $0x3a0] sm:$0xff]
        %v512 = vld [vmem:[#allocation2 + $0x3a8] sm:$0xff]
        %v513 = vld [vmem:[#allocation2 + $0x3b0] sm:$0xff]
        %v514 = vld [vmem:[#allocation2 + $0x3b8] sm:$0xff]
        %v515 = vld [vmem:[#allocation2 + $0x3c0] sm:$0xff]
        %v516 = vld [vmem:[#allocation2 + $0x3c8] sm:$0xff]
        %v517 = vld [vmem:[#allocation2 + $0x3d0] sm:$0xff]
        %v518 = vld [vmem:[#allocation2 + $0x3d8] sm:$0xff]
        %v519 = vld [vmem:[#allocation2 + $0x3e0] sm:$0xff]
        %v520 = vld [vmem:[#allocation2 + $0x3e8] sm:$0xff]
        %v521 = vld [vmem:[#allocation2 + $0x3f0] sm:$0xff]
        %v522 = vld [vmem:[#allocation2 + $0x3f8] sm:$0xff]
        %v523 = vld [vmem:[#allocation2 + $0x400] sm:$0xff]
        %v524 = vld [vmem:[#allocation2 + $0x408] sm:$0xff]
        %v525 = vld [vmem:[#allocation2 + $0x410] sm:$0xff]
        %v526 = vld [vmem:[#allocation2 + $0x418] sm:$0xff]
        %v527 = vld [vmem:[#allocation2 + $0x420] sm:$0xff]
        %v528 = vld [vmem:[#allocation2 + $0x428] sm:$0xff]
        %v529 = vld [vmem:[#allocation2 + $0x430] sm:$0xff]
        %v530 = vld [vmem:[#allocation2 + $0x438] sm:$0xff]
        %v531 = vld [vmem:[#allocation2 + $0x440] sm:$0xff]
        %v532 = vld [vmem:[#allocation2 + $0x448] sm:$0xff]
        %v533 = vld [vmem:[#allocation2 + $0x450] sm:$0xff]
        %v534 = vld [vmem:[#allocation2 + $0x458] sm:$0xff]
        %v535 = vld [vmem:[#allocation2 + $0x460] sm:$0xff]
        %v536 = vld [vmem:[#allocation2 + $0x468] sm:$0xff]
        %v537 = vld [vmem:[#allocation2 + $0x470] sm:$0xff]
        %v538 = vld [vmem:[#allocation2 + $0x478] sm:$0xff]
        %v539 = vld [vmem:[#allocation2 + $0x480] sm:$0xff]
        %v540 = vld [vmem:[#allocation2 + $0x488] sm:$0xff]
        %v541 = vld [vmem:[#allocation2 + $0x490] sm:$0xff]
        %v542 = vld [vmem:[#allocation2 + $0x498] sm:$0xff]
        %v543 = vld [vmem:[#allocation2 + $0x4a0] sm:$0xff]
        %v544 = vld [vmem:[#allocation2 + $0x4a8] sm:$0xff]
        %v545 = vld [vmem:[#allocation2 + $0x4b0] sm:$0xff]
        %v546 = vld [vmem:[#allocation2 + $0x4b8] sm:$0xff]
        %v547 = vld [vmem:[#allocation2 + $0x4c0] sm:$0xff]
        %v548 = vld [vmem:[#allocation2 + $0x4c8] sm:$0xff]
        %v549 = vld [vmem:[#allocation2 + $0x4d0] sm:$0xff]
        %v550 = vld [vmem:[#allocation2 + $0x4d8] sm:$0xff]
        %v551 = vld [vmem:[#allocation2 + $0x4e0] sm:$0xff]
        %v552 = vld [vmem:[#allocation2 + $0x4e8] sm:$0xff]
        %v553 = vld [vmem:[#allocation2 + $0x4f0] sm:$0xff]
        %v554 = vld [vmem:[#allocation2 + $0x4f8] sm:$0xff]
        %v555 = vld [vmem:[#allocation2 + $0x500] sm:$0xff]
        %v556 = vld [vmem:[#allocation2 + $0x508] sm:$0xff]
        %v557 = vld [vmem:[#allocation2 + $0x510] sm:$0xff]
        %v558 = vld [vmem:[#allocation2 + $0x518] sm:$0xff]
        %v559 = vld [vmem:[#allocation2 + $0x520] sm:$0xff]
        %v560 = vld [vmem:[#allocation2 + $0x528] sm:$0xff]
        %v561 = vld [vmem:[#allocation2 + $0x530] sm:$0xff]
        %v562 = vld [vmem:[#allocation2 + $0x538] sm:$0xff]
        %v563 = vld [vmem:[#allocation2 + $0x540] sm:$0xff]
        %v564 = vld [vmem:[#allocation2 + $0x548] sm:$0xff]
        %v565 = vld [vmem:[#allocation2 + $0x550] sm:$0xff]
        %v566 = vld [vmem:[#allocation2 + $0x558] sm:$0xff]
        %v567 = vld [vmem:[#allocation2 + $0x560] sm:$0xff]
        %v568 = vld [vmem:[#allocation2 + $0x568] sm:$0xff]
        %v569 = vld [vmem:[#allocation2 + $0x570] sm:$0xff]
        %v570 = vld [vmem:[#allocation2 + $0x578] sm:$0xff]
        %v571 = vld [vmem:[#allocation2 + $0x580] sm:$0xff]
        %v572 = vld [vmem:[#allocation2 + $0x588] sm:$0xff]
        %v573 = vld [vmem:[#allocation2 + $0x590] sm:$0xff]
        %v574 = vld [vmem:[#allocation2 + $0x598] sm:$0xff]
        %v575 = vld [vmem:[#allocation2 + $0x5a0] sm:$0xff]
        %v576 = vld [vmem:[#allocation2 + $0x5a8] sm:$0xff]
        %v577 = vld [vmem:[#allocation2 + $0x5b0] sm:$0xff]
        %v578 = vld [vmem:[#allocation2 + $0x5b8] sm:$0xff]
        %v579 = vld [vmem:[#allocation2 + $0x5c0] sm:$0xff]
        %v580 = vld [vmem:[#allocation2 + $0x5c8] sm:$0xff]
        %v581 = vld [vmem:[#allocation2 + $0x5d0] sm:$0xff]
        %v582 = vld [vmem:[#allocation2 + $0x5d8] sm:$0xff]
        %v583 = vld [vmem:[#allocation2 + $0x5e0] sm:$0xff]
        %v584 = vld [vmem:[#allocation2 + $0x5e8] sm:$0xff]
        %v585 = vld [vmem:[#allocation2 + $0x5f0] sm:$0xff]
        %v586 = vld [vmem:[#allocation2 + $0x5f8] sm:$0xff]
        %587 = vmatprep.subr.mxu0 %v396
        %588 = vmatpush1.msra.mxu0 %v395
        %589 = vmatprep.subr.mxu0 %v398
        %590 = vmatpush1.msra.mxu0 %v397
        %591 = vmatprep.subr.mxu0 %v400
        %592 = vmatpush1.msra.mxu0 %v399
        %593 = vmatprep.subr.mxu0 %v402
        %594 = vmatpush1.msra.mxu0 %v401
        %595 = vmatprep.subr.mxu0 %v404
        %596 = vmatpush1.msra.mxu0 %v403
        %597 = vmatprep.subr.mxu0 %v406
        %598 = vmatpush1.msra.mxu0 %v405
        %599 = vmatprep.subr.mxu0 %v408
        %600 = vmatpush1.msra.mxu0 %v407
        %601 = vmatprep.subr.mxu0 %v410
        %602 = vmatpush1.msra.mxu0 %v409
        %603 = vmatprep.subr.mxu0 %v412
        %604 = vmatpush1.msra.mxu0 %v411
        %605 = vmatprep.subr.mxu0 %v414
        %606 = vmatpush1.msra.mxu0 %v413
        %607 = vmatprep.subr.mxu0 %v416
        %608 = vmatpush1.msra.mxu0 %v415
        %609 = vmatprep.subr.mxu0 %v418
        %610 = vmatpush1.msra.mxu0 %v417
        %611 = vmatprep.subr.mxu0 %v420
        %612 = vmatpush1.msra.mxu0 %v419
        %613 = vmatprep.subr.mxu0 %v422
        %614 = vmatpush1.msra.mxu0 %v421
        %615 = vmatprep.subr.mxu0 %v424
        %616 = vmatpush1.msra.mxu0 %v423
        %617 = vmatprep.subr.mxu0 %v426
        %618 = vmatpush1.msra.mxu0 %v425
        %619 = vmatprep.subr.mxu0 %v428
        %620 = vmatpush1.msra.mxu0 %v427
        %621 = vmatprep.subr.mxu0 %v430
        %622 = vmatpush1.msra.mxu0 %v429
        %623 = vmatprep.subr.mxu0 %v432
        %624 = vmatpush1.msra.mxu0 %v431
        %625 = vmatprep.subr.mxu0 %v434
        %626 = vmatpush1.msra.mxu0 %v433
        %627 = vmatprep.subr.mxu0 %v436
        %628 = vmatpush1.msra.mxu0 %v435
        %629 = vmatprep.subr.mxu0 %v438
        %630 = vmatpush1.msra.mxu0 %v437
        %631 = vmatprep.subr.mxu0 %v440
        %632 = vmatpush1.msra.mxu0 %v439
        %633 = vmatprep.subr.mxu0 %v442
        %634 = vmatpush1.msra.mxu0 %v441
        %635 = vmatprep.subr.mxu0 %v444
        %636 = vmatpush1.msra.mxu0 %v443
        %637 = vmatprep.subr.mxu0 %v446
        %638 = vmatpush1.msra.mxu0 %v445
        %639 = vmatprep.subr.mxu0 %v448
        %640 = vmatpush1.msra.mxu0 %v447
        %641 = vmatprep.subr.mxu0 %v450
        %642 = vmatpush1.msra.mxu0 %v449
        %643 = vmatprep.subr.mxu0 %v452
        %644 = vmatpush1.msra.mxu0 %v451
        %645 = vmatprep.subr.mxu0 %v454
        %646 = vmatpush1.msra.mxu0 %v453
        %647 = vmatprep.subr.mxu0 %v456
        %648 = vmatpush1.msra.mxu0 %v455
        %649 = vmatprep.subr.mxu0 %v458
        %650 = vmatpush1.msra.mxu0 %v457
        %651 = vmatprep.mubr.f32.mxu0 %v381
        %652 = vmatmul.mubr.f32.gmra.mrb[0].mxu0 %v380
        %v653 = vpop.f32.mrb[0].mxu0
        %v654 = vadd.f32 0.0, %v653
        %v655 = vpop.f32.mrb[0].mxu0
        %v656 = vadd.f32 0.0, %v655
        %657 = vmatprep.mubr.f32.mxu0 %v375
        %658 = vmatmul.mubr.f32.gmra.mrb[0].mxu0 %v373
        %v659 = vpop.f32.mrb[0].mxu0
        %v660 = vadd.f32 0.0, %v659
        %v661 = vpop.f32.mrb[0].mxu0
        %v662 = vadd.f32 0.0, %v661
        %663 = vdwg.mxu0
        %664 = vmatprep.subr.mxu0 %v460
        %665 = vmatpush1.msra.mxu0 %v459
        %666 = vmatprep.subr.mxu0 %v462
        %667 = vmatpush1.msra.mxu0 %v461
        %668 = vmatprep.subr.mxu0 %v464
        %669 = vmatpush1.msra.mxu0 %v463
        %670 = vmatprep.subr.mxu0 %v466
        %671 = vmatpush1.msra.mxu0 %v465
        %672 = vmatprep.subr.mxu0 %v468
        %673 = vmatpush1.msra.mxu0 %v467
        %674 = vmatprep.subr.mxu0 %v470
        %675 = vmatpush1.msra.mxu0 %v469
        %676 = vmatprep.subr.mxu0 %v472
        %677 = vmatpush1.msra.mxu0 %v471
        %678 = vmatprep.subr.mxu0 %v474
        %679 = vmatpush1.msra.mxu0 %v473
        %680 = vmatprep.subr.mxu0 %v476
        %681 = vmatpush1.msra.mxu0 %v475
        %682 = vmatprep.subr.mxu0 %v478
        %683 = vmatpush1.msra.mxu0 %v477
        %684 = vmatprep.subr.mxu0 %v480
        %685 = vmatpush1.msra.mxu0 %v479
        %686 = vmatprep.subr.mxu0 %v482
        %687 = vmatpush1.msra.mxu0 %v481
        %688 = vmatprep.subr.mxu0 %v484
        %689 = vmatpush1.msra.mxu0 %v483
        %690 = vmatprep.subr.mxu0 %v486
        %691 = vmatpush1.msra.mxu0 %v485
        %692 = vmatprep.subr.mxu0 %v488
        %693 = vmatpush1.msra.mxu0 %v487
        %694 = vmatprep.subr.mxu0 %v490
        %695 = vmatpush1.msra.mxu0 %v489
        %696 = vmatprep.subr.mxu0 %v492
        %697 = vmatpush1.msra.mxu0 %v491
        %698 = vmatprep.subr.mxu0 %v494
        %699 = vmatpush1.msra.mxu0 %v493
        %700 = vmatprep.subr.mxu0 %v496
        %701 = vmatpush1.msra.mxu0 %v495
        %702 = vmatprep.subr.mxu0 %v498
        %703 = vmatpush1.msra.mxu0 %v497
        %704 = vmatprep.subr.mxu0 %v500
        %705 = vmatpush1.msra.mxu0 %v499
        %706 = vmatprep.subr.mxu0 %v502
        %707 = vmatpush1.msra.mxu0 %v501
        %708 = vmatprep.subr.mxu0 %v504
        %709 = vmatpush1.msra.mxu0 %v503
        %710 = vmatprep.subr.mxu0 %v506
        %711 = vmatpush1.msra.mxu0 %v505
        %712 = vmatprep.subr.mxu0 %v508
        %713 = vmatpush1.msra.mxu0 %v507
        %714 = vmatprep.subr.mxu0 %v510
        %715 = vmatpush1.msra.mxu0 %v509
        %716 = vmatprep.subr.mxu0 %v512
        %717 = vmatpush1.msra.mxu0 %v511
        %718 = vmatprep.subr.mxu0 %v514
        %719 = vmatpush1.msra.mxu0 %v513
        %720 = vmatprep.subr.mxu0 %v516
        %721 = vmatpush1.msra.mxu0 %v515
        %722 = vmatprep.subr.mxu0 %v518
        %723 = vmatpush1.msra.mxu0 %v517
        %724 = vmatprep.subr.mxu0 %v520
        %725 = vmatpush1.msra.mxu0 %v519
        %726 = vmatprep.subr.mxu0 %v522
        %727 = vmatpush1.msra.mxu0 %v521
        %728 = vmatprep.mubr.f32.mxu0 %v362
        %729 = vmatmul.mubr.f32.gmra.mrb[0].mxu0 %v361
        %v730 = vpop.f32.mrb[0].mxu0
        %v731 = vadd.f32 %v654, %v730
        %v732 = vpop.f32.mrb[0].mxu0
        %v733 = vadd.f32 %v656, %v732
        %734 = vmatprep.mubr.f32.mxu0 %v364
        %735 = vmatmul.mubr.f32.gmra.mrb[0].mxu0 %v363
        %v736 = vpop.f32.mrb[0].mxu0
        %v737 = vadd.f32 %v660, %v736
        %v738 = vpop.f32.mrb[0].mxu0
        %v739 = vadd.f32 %v662, %v738
        %740 = vdwg.mxu0
        %741 = vmatprep.subr.mxu0 %v524
        %742 = vmatpush1.msra.mxu0 %v523
        %743 = vmatprep.subr.mxu0 %v526
        %744 = vmatpush1.msra.mxu0 %v525
        %745 = vmatprep.subr.mxu0 %v528
        %746 = vmatpush1.msra.mxu0 %v527
        %747 = vmatprep.subr.mxu0 %v530
        %748 = vmatpush1.msra.mxu0 %v529
        %749 = vmatprep.subr.mxu0 %v532
        %750 = vmatpush1.msra.mxu0 %v531
        %751 = vmatprep.subr.mxu0 %v534
        %752 = vmatpush1.msra.mxu0 %v533
        %753 = vmatprep.subr.mxu0 %v536
        %754 = vmatpush1.msra.mxu0 %v535
        %755 = vmatprep.subr.mxu0 %v538
        %756 = vmatpush1.msra.mxu0 %v537
        %757 = vmatprep.subr.mxu0 %v540
        %758 = vmatpush1.msra.mxu0 %v539
        %759 = vmatprep.subr.mxu0 %v542
        %760 = vmatpush1.msra.mxu0 %v541
        %761 = vmatprep.subr.mxu0 %v544
        %762 = vmatpush1.msra.mxu0 %v543
        %763 = vmatprep.subr.mxu0 %v546
        %764 = vmatpush1.msra.mxu0 %v545
        %765 = vmatprep.subr.mxu0 %v548
        %766 = vmatpush1.msra.mxu0 %v547
        %767 = vmatprep.subr.mxu0 %v550
        %768 = vmatpush1.msra.mxu0 %v549
        %769 = vmatprep.subr.mxu0 %v552
        %770 = vmatpush1.msra.mxu0 %v551
        %771 = vmatprep.subr.mxu0 %v554
        %772 = vmatpush1.msra.mxu0 %v553
        %773 = vmatprep.subr.mxu0 %v556
        %774 = vmatpush1.msra.mxu0 %v555
        %775 = vmatprep.subr.mxu0 %v558
        %776 = vmatpush1.msra.mxu0 %v557
        %777 = vmatprep.subr.mxu0 %v560
        %778 = vmatpush1.msra.mxu0 %v559
        %779 = vmatprep.subr.mxu0 %v562
        %780 = vmatpush1.msra.mxu0 %v561
        %781 = vmatprep.subr.mxu0 %v564
        %782 = vmatpush1.msra.mxu0 %v563
        %783 = vmatprep.subr.mxu0 %v566
        %784 = vmatpush1.msra.mxu0 %v565
        %785 = vmatprep.subr.mxu0 %v568
        %786 = vmatpush1.msra.mxu0 %v567
        %787 = vmatprep.subr.mxu0 %v570
        %788 = vmatpush1.msra.mxu0 %v569
        %789 = vmatprep.subr.mxu0 %v572
        %790 = vmatpush1.msra.mxu0 %v571
        %791 = vmatprep.subr.mxu0 %v574
        %792 = vmatpush1.msra.mxu0 %v573
        %793 = vmatprep.subr.mxu0 %v576
        %794 = vmatpush1.msra.mxu0 %v575
        %795 = vmatprep.subr.mxu0 %v578
        %796 = vmatpush1.msra.mxu0 %v577
        %797 = vmatprep.subr.mxu0 %v580
        %798 = vmatpush1.msra.mxu0 %v579
        %799 = vmatprep.subr.mxu0 %v582
        %800 = vmatpush1.msra.mxu0 %v581
        %801 = vmatprep.subr.mxu0 %v584
        %802 = vmatpush1.msra.mxu0 %v583
        %803 = vmatprep.subr.mxu0 %v586
        %804 = vmatpush1.msra.mxu0 %v585
        %805 = vmatprep.mubr.f32.mxu0 %v388
        %806 = vmatmul.mubr.f32.gmra.mrb[0].mxu0 %v385
        %v807 = vpop.f32.mrb[0].mxu0
        %v808 = vadd.f32 %v731, %v807
        %v809 = vpop.f32.mrb[0].mxu0
        %v810 = vadd.f32 %v733, %v809
        %811 = vmatprep.mubr.f32.mxu0 %v394
        %812 = vmatmul.mubr.f32.gmra.mrb[0].mxu0 %v393
        %v813 = vpop.f32.mrb[0].mxu0
        %v814 = vadd.f32 %v737, %v813
        %v815 = vpop.f32.mrb[0].mxu0
        %v816 = vadd.f32 %v739, %v815
        %817 = vdwg.mxu0
        %v818 = vld [vmem:[%s3] sm:$0x3]
        %v819 = vld [vmem:[%s4] sm:$0x3]
        %v820 = vadd.f32 %v808, %v814
        %v821 = vrot.slane %v820, 4
        %v822 = vadd.f32 %v820, %v821
        %v823 = vrot.slane %v822, 2
        %v824 = vadd.f32 %v822, %v823
        %v825 = vrot.slane %v824, 1
        %v826 = vadd.f32 %v824, %v825
        %v827 = vadd.f32 %v810, %v816
        %v828 = vrot.slane %v827, 4
        %v829 = vadd.f32 %v827, %v828
        %v830 = vrot.slane %v829, 2
        %v831 = vadd.f32 %v829, %v830
        %v832 = vrot.slane %v831, 1
        %v833 = vadd.f32 %v831, %v832
        %v834 = vmul.f32 %v808, %v808
        %v835 = vmul.f32 %v810, %v810
        %v836 = vmul.f32 %v814, %v814
        %v837 = vmul.f32 %v816, %v816
        %v838 = vadd.f32 %v834, %v836
        %v839 = vrot.slane %v838, 4
        %v840 = vadd.f32 %v838, %v839
        %v841 = vrot.slane %v840, 2
        %v842 = vadd.f32 %v840, %v841
        %v843 = vrot.slane %v842, 1
        %v844 = vadd.f32 %v842, %v843
        %v845 = vadd.f32 %v835, %v837
        %v846 = vrot.slane %v845, 4
        %v847 = vadd.f32 %v845, %v846
        %v848 = vrot.slane %v847, 2
        %v849 = vadd.f32 %v847, %v848
        %v850 = vrot.slane %v849, 1
        %v851 = vadd.f32 %v849, %v850
        %v852 = vsel %vm369, %v826, %v844
        %v853 = vsel %vm369, %v833, %v851
        %v854 = vld [vmem:[%s7] sm:$0xff]
        %v855 = vld [vmem:[%s7 + $0x8] sm:$0xff]
        %v856 = vld [vmem:[%s7 + $0x10] sm:$0xff]
        %v857 = vld [vmem:[%s7 + $0x18] sm:$0xff]
        %v858 = vld [vmem:[%s7 + $0x20] sm:$0xff]
        %v859 = vld [vmem:[%s7 + $0x28] sm:$0xff]
        %v860 = vld [vmem:[%s7 + $0x30] sm:$0xff]
        %v861 = vld [vmem:[%s7 + $0x38] sm:$0xff]
        %v862 = vld [vmem:[%s7 + $0x40] sm:$0xff]
        %v863 = vld [vmem:[%s7 + $0x48] sm:$0xff]
        %v864 = vld [vmem:[%s7 + $0x50] sm:$0xff]
        %v865 = vld [vmem:[%s7 + $0x58] sm:$0xff]
        %v866 = vld [vmem:[%s7 + $0x60] sm:$0xff]
        %v867 = vld [vmem:[%s7 + $0x68] sm:$0xff]
        %v868 = vld [vmem:[%s7 + $0x70] sm:$0xff]
        %v869 = vld [vmem:[%s7 + $0x78] sm:$0xff]
        %v870 = vld [vmem:[%s7 + $0x80] sm:$0xff]
        %v871 = vld [vmem:[%s7 + $0x88] sm:$0xff]
        %v872 = vld [vmem:[%s7 + $0x90] sm:$0xff]
        %v873 = vld [vmem:[%s7 + $0x98] sm:$0xff]
        %v874 = vld [vmem:[%s7 + $0xa0] sm:$0xff]
        %v875 = vld [vmem:[%s7 + $0xa8] sm:$0xff]
        %v876 = vld [vmem:[%s7 + $0xb0] sm:$0xff]
        %v877 = vld [vmem:[%s7 + $0xb8] sm:$0xff]
        %v878 = vld [vmem:[%s7 + $0xc0] sm:$0xff]
        %v879 = vld [vmem:[%s7 + $0xc8] sm:$0xff]
        %v880 = vld [vmem:[%s7 + $0xd0] sm:$0xff]
        %v881 = vld [vmem:[%s7 + $0xd8] sm:$0xff]
        %v882 = vld [vmem:[%s7 + $0xe0] sm:$0xff]
        %v883 = vld [vmem:[%s7 + $0xe8] sm:$0xff]
        %v884 = vld [vmem:[%s7 + $0xf0] sm:$0xff]
        %v885 = vld [vmem:[%s7 + $0xf8] sm:$0xff]
        %886 = vmatprep.subr.mxu0 0.0
        %887 = vmatpush1.msra.mxu0 %v854
        %888 = vmatprep.subr.mxu0 0.0
        %889 = vmatpush1.msra.mxu0 %v855
        %890 = vmatprep.subr.mxu0 0.0
        %891 = vmatpush1.msra.mxu0 %v856
        %892 = vmatprep.subr.mxu0 0.0
        %893 = vmatpush1.msra.mxu0 %v857
        %894 = vmatprep.subr.mxu0 0.0
        %895 = vmatpush1.msra.mxu0 %v858
        %896 = vmatprep.subr.mxu0 0.0
        %897 = vmatpush1.msra.mxu0 %v859
        %898 = vmatprep.subr.mxu0 0.0
        %899 = vmatpush1.msra.mxu0 %v860
        %900 = vmatprep.subr.mxu0 0.0
        %901 = vmatpush1.msra.mxu0 %v861
        %902 = vmatprep.subr.mxu0 0.0
        %903 = vmatpush1.msra.mxu0 %v862
        %904 = vmatprep.subr.mxu0 0.0
        %905 = vmatpush1.msra.mxu0 %v863
        %906 = vmatprep.subr.mxu0 0.0
        %907 = vmatpush1.msra.mxu0 %v864
        %908 = vmatprep.subr.mxu0 0.0
        %909 = vmatpush1.msra.mxu0 %v865
        %910 = vmatprep.subr.mxu0 0.0
        %911 = vmatpush1.msra.mxu0 %v866
        %912 = vmatprep.subr.mxu0 0.0
        %913 = vmatpush1.msra.mxu0 %v867
        %914 = vmatprep.subr.mxu0 0.0
        %915 = vmatpush1.msra.mxu0 %v868
        %916 = vmatprep.subr.mxu0 0.0
        %917 = vmatpush1.msra.mxu0 %v869
        %918 = vmatprep.subr.mxu0 0.0
        %919 = vmatpush1.msra.mxu0 %v870
        %920 = vmatprep.subr.mxu0 0.0
        %921 = vmatpush1.msra.mxu0 %v871
        %922 = vmatprep.subr.mxu0 0.0
        %923 = vmatpush1.msra.mxu0 %v872
        %924 = vmatprep.subr.mxu0 0.0
        %925 = vmatpush1.msra.mxu0 %v873
        %926 = vmatprep.subr.mxu0 0.0
        %927 = vmatpush1.msra.mxu0 %v874
        %928 = vmatprep.subr.mxu0 0.0
        %929 = vmatpush1.msra.mxu0 %v875
        %930 = vmatprep.subr.mxu0 0.0
        %931 = vmatpush1.msra.mxu0 %v876
        %932 = vmatprep.subr.mxu0 0.0
        %933 = vmatpush1.msra.mxu0 %v877
        %934 = vmatprep.subr.mxu0 0.0
        %935 = vmatpush1.msra.mxu0 %v878
        %936 = vmatprep.subr.mxu0 0.0
        %937 = vmatpush1.msra.mxu0 %v879
        %938 = vmatprep.subr.mxu0 0.0
        %939 = vmatpush1.msra.mxu0 %v880
        %940 = vmatprep.subr.mxu0 0.0
        %941 = vmatpush1.msra.mxu0 %v881
        %942 = vmatprep.subr.mxu0 0.0
        %943 = vmatpush1.msra.mxu0 %v882
        %944 = vmatprep.subr.mxu0 0.0
        %945 = vmatpush1.msra.mxu0 %v883
        %946 = vmatprep.subr.mxu0 0.0
        %947 = vmatpush1.msra.mxu0 %v884
        %948 = vmatprep.subr.mxu0 0.0
        %949 = vmatpush1.msra.mxu0 %v885
        %950 = vmatprep.mubr.f32.mxu0 %v853
        %951 = vmatmul.mubr.f32.gmra.mrb[0].mxu0 %v852
        %v952 = vpop.f32.mrb[0].mxu0
        %v953 = vadd.f32 0.0, %v952
        %v954 = vpop.f32.mrb[0].mxu0
        %955 = vdwg.mxu0
        %v956 = vrcp.pop 512.0
        %v957 = vmul.f32 %v953, %v956
        %v958 = vmul.f32 %v957, %v957
        %v960 = vrot.slane %v958, 7
        %v962 = vsub.f32 %v957, %v960
        %v963 = vmax.f32 %v962, 0.0
        %v964 = vsel %vm369, %v957, %v963
        %v965 = vld [vmem:[%s8] sm:$0xff]
        %v966 = vld [vmem:[%s8 + $0x8] sm:$0xff]
        %vm967 = vcmask 64512
        %v969 = vsel %vm967, %v964, 0
        %971 = vmatprep.subr.mxu0 %v966
        %972 = vmatpush1.msra.mxu0 %v965
        %973 = vmatprep.subr.mxu0 0.0
        %974 = vmatpush1.msra.mxu0 0.0
        %975 = vmatprep.subr.mxu0 0.0
        %976 = vmatpush1.msra.mxu0 0.0
        %977 = vmatprep.subr.mxu0 0.0
        %978 = vmatpush1.msra.mxu0 0.0
        %979 = vmatprep.subr.mxu0 0.0
        %980 = vmatpush1.msra.mxu0 0.0
        %981 = vmatprep.subr.mxu0 0.0
        %982 = vmatpush1.msra.mxu0 0.0
        %983 = vmatprep.subr.mxu0 0.0
        %984 = vmatpush1.msra.mxu0 0.0
        %985 = vmatprep.subr.mxu0 0.0
        %986 = vmatpush1.msra.mxu0 0.0
        %987 = vmatprep.subr.mxu0 0.0
        %988 = vmatpush1.msra.mxu0 0.0
        %989 = vmatprep.subr.mxu0 0.0
        %990 = vmatpush1.msra.mxu0 0.0
        %991 = vmatprep.subr.mxu0 0.0
        %992 = vmatpush1.msra.mxu0 0.0
        %993 = vmatprep.subr.mxu0 0.0
        %994 = vmatpush1.msra.mxu0 0.0
        %995 = vmatprep.subr.mxu0 0.0
        %996 = vmatpush1.msra.mxu0 0.0
        %997 = vmatprep.subr.mxu0 0.0
        %998 = vmatpush1.msra.mxu0 0.0
        %999 = vmatprep.subr.mxu0 0.0
        %1000 = vmatpush1.msra.mxu0 0.0
        %1001 = vmatprep.subr.mxu0 0.0
        %1002 = vmatpush1.msra.mxu0 0.0
        %1003 = vmatprep.subr.mxu0 0.0
        %1004 = vmatpush1.msra.mxu0 0.0
        %1005 = vmatprep.subr.mxu0 0.0
        %1006 = vmatpush1.msra.mxu0 0.0
        %1007 = vmatprep.subr.mxu0 0.0
        %1008 = vmatpush1.msra.mxu0 0.0
        %1009 = vmatprep.subr.mxu0 0.0
        %1010 = vmatpush1.msra.mxu0 0.0
        %1011 = vmatprep.subr.mxu0 0.0
        %1012 = vmatpush1.msra.mxu0 0.0
        %1013 = vmatprep.subr.mxu0 0.0
        %1014 = vmatpush1.msra.mxu0 0.0
        %1015 = vmatprep.subr.mxu0 0.0
        %1016 = vmatpush1.msra.mxu0 0.0
        %1017 = vmatprep.subr.mxu0 0.0
        %1018 = vmatpush1.msra.mxu0 0.0
        %1019 = vmatprep.subr.mxu0 0.0
        %1020 = vmatpush1.msra.mxu0 0.0
        %1021 = vmatprep.subr.mxu0 0.0
        %1022 = vmatpush1.msra.mxu0 0.0
        %1023 = vmatprep.subr.mxu0 0.0
        %1024 = vmatpush1.msra.mxu0 0.0
        %1025 = vmatprep.subr.mxu0 0.0
        %1026 = vmatpush1.msra.mxu0 0.0
        %1027 = vmatprep.subr.mxu0 0.0
        %1028 = vmatpush1.msra.mxu0 0.0
        %1029 = vmatprep.subr.mxu0 0.0
        %1030 = vmatpush1.msra.mxu0 0.0
        %1031 = vmatprep.subr.mxu0 0.0
        %1032 = vmatpush1.msra.mxu0 0.0
        %1033 = vmatprep.subr.mxu0 0.0
        %1034 = vmatpush1.msra.mxu0 0.0
        %1035 = vmatprep.mubr.f32.mxu0 0.0
        %1036 = vmatmul.mubr.f32.gmra.mrb[0].mxu0 %v969
        %v1037 = vpop.f32.mrb[0].mxu0
        %v1038 = vadd.f32 0.0, %v1037
        %v1039 = vpop.f32.mrb[0].mxu0
        %v1040 = vadd.f32 0.0, %v1039
        %1041 = vdwg.mxu0
        %v1042 = vadd.f32 %v1038, 1e-05
        %v1043 = vadd.f32 %v1040, 1e-05
        %v1044 = vrsqrt.pop %v1042
        %v1045 = vrsqrt.pop %v1043
        %v1046 = vlaneseq
        %v1047 = vshrl.u32 %v1046, 7
        %v1048 = vsub.s32 0, %v1047
        %v1049 = vrot.slane %v1038, %v1048
        %v1050 = vlaneseq
        %v1051 = vshrl.u32 %v1050, 7
        %v1052 = vsub.s32 0, %v1051
        %v1053 = vrot.slane %v1040, %v1052
        %v1054 = vsub.f32 %v808, %v1049
        %v1055 = vsub.f32 %v810, %v1053
        %v1056 = vsub.f32 %v814, %v1049
        %v1057 = vsub.f32 %v816, %v1053
        %v1058 = vlaneseq
        %v1059 = vshrl.u32 %v1058, 7
        %v1060 = vsub.s32 1, %v1059
        %v1061 = vrot.slane %v1044, %v1060
        %v1062 = vlaneseq
        %v1063 = vshrl.u32 %v1062, 7
        %v1064 = vsub.s32 1, %v1063
        %v1065 = vrot.slane %v1045, %v1064
        %v1066 = vmul.f32 %v1054, %v1061
        %v1067 = vmul.f32 %v1055, %v1065
        %v1068 = vmul.f32 %v1056, %v1061
        %v1069 = vmul.f32 %v1057, %v1065
        %v1071 = vlaneseq
        %v1072 = vshrl.u32 %v1071, 7
        %v1073 = vsub.s32 0, %v1072
        %v1074 = vrot.slane %v818, %v1073
        %v1075 = vlaneseq
        %v1076 = vshrl.u32 %v1075, 7
        %v1077 = vsub.s32 1, %v1076
        %v1078 = vrot.slane %v818, %v1077
        %v1081 = vmul.f32 %v1066, %v1074
        %v1082 = vmul.f32 %v1067, %v1078
        %v1083 = vmul.f32 %v1068, %v1074
        %v1084 = vmul.f32 %v1069, %v1078
        %v1086 = vlaneseq
        %v1087 = vshrl.u32 %v1086, 7
        %v1088 = vsub.s32 0, %v1087
        %v1089 = vrot.slane %v819, %v1088
        %v1090 = vlaneseq
        %v1091 = vshrl.u32 %v1090, 7
        %v1092 = vsub.s32 1, %v1091
        %v1093 = vrot.slane %v819, %v1092
        %v1096 = vadd.f32 %v1081, %v1089
        %v1097 = vadd.f32 %v1082, %v1093
        %v1098 = vadd.f32 %v1083, %v1089
        %v1099 = vadd.f32 %v1084, %v1093
        %v1100 = vmax.f32 %v1096, 0.0
        %v1101 = vmax.f32 %v1097, 0.0
        %v1102 = vmax.f32 %v1098, 0.0
        %v1103 = vmax.f32 %v1099, 0.0
        %v1108 = vrot.slane %v1100, 7
        %v1109 = vrot.slane %v1101, 7
        %v1110 = vrot.slane %v1102, 7
        %v1111 = vsel %vm369, %v1108, %v1110
        %v1112 = vrot.slane %v1103, 7
        %v1113 = vsel %vm369, %v1109, %v1112
        %v1118 = vsel %vm369, 0.0, %v1108
        %v1119 = vsel %vm369, 0.0, %v1109
        %v1120 = vrot.slane %v1100, 1
        %v1121 = vrot.slane %v1102, 1
        %v1122 = vsel %vm382, %v1120, %v1121
        %v1123 = vrot.slane %v1101, 1
        %v1124 = vrot.slane %v1103, 1
        %v1125 = vsel %vm382, %v1123, %v1124
        %v1130 = vsel %vm382, %v1121, 0.0
        %v1131 = vsel %vm382, %v1124, 0.0
        %v1132 = vld [vmem:[#allocation5] sm:$0xff]
        %v1133 = vld [vmem:[#allocation5 + $0x8] sm:$0xff]
        %v1134 = vld [vmem:[#allocation5 + $0x10] sm:$0xff]
        %v1135 = vld [vmem:[#allocation5 + $0x18] sm:$0xff]
        %v1136 = vld [vmem:[#allocation5 + $0x20] sm:$0xff]
        %v1137 = vld [vmem:[#allocation5 + $0x28] sm:$0xff]
        %v1138 = vld [vmem:[#allocation5 + $0x30] sm:$0xff]
        %v1139 = vld [vmem:[#allocation5 + $0x38] sm:$0xff]
        %v1140 = vld [vmem:[#allocation5 + $0x40] sm:$0xff]
        %v1141 = vld [vmem:[#allocation5 + $0x48] sm:$0xff]
        %v1142 = vld [vmem:[#allocation5 + $0x50] sm:$0xff]
        %v1143 = vld [vmem:[#allocation5 + $0x58] sm:$0xff]
        %v1144 = vld [vmem:[#allocation5 + $0x60] sm:$0xff]
        %v1145 = vld [vmem:[#allocation5 + $0x68] sm:$0xff]
        %v1146 = vld [vmem:[#allocation5 + $0x70] sm:$0xff]
        %v1147 = vld [vmem:[#allocation5 + $0x78] sm:$0xff]
        %v1148 = vld [vmem:[#allocation5 + $0x80] sm:$0xff]
        %v1149 = vld [vmem:[#allocation5 + $0x88] sm:$0xff]
        %v1150 = vld [vmem:[#allocation5 + $0x90] sm:$0xff]
        %v1151 = vld [vmem:[#allocation5 + $0x98] sm:$0xff]
        %v1152 = vld [vmem:[#allocation5 + $0xa0] sm:$0xff]
        %v1153 = vld [vmem:[#allocation5 + $0xa8] sm:$0xff]
        %v1154 = vld [vmem:[#allocation5 + $0xb0] sm:$0xff]
        %v1155 = vld [vmem:[#allocation5 + $0xb8] sm:$0xff]
        %v1156 = vld [vmem:[#allocation5 + $0xc0] sm:$0xff]
        %v1157 = vld [vmem:[#allocation5 + $0xc8] sm:$0xff]
        %v1158 = vld [vmem:[#allocation5 + $0xd0] sm:$0xff]
        %v1159 = vld [vmem:[#allocation5 + $0xd8] sm:$0xff]
        %v1160 = vld [vmem:[#allocation5 + $0xe0] sm:$0xff]
        %v1161 = vld [vmem:[#allocation5 + $0xe8] sm:$0xff]
        %v1162 = vld [vmem:[#allocation5 + $0xf0] sm:$0xff]
        %v1163 = vld [vmem:[#allocation5 + $0xf8] sm:$0xff]
        %v1164 = vld [vmem:[#allocation5 + $0x100] sm:$0xff]
        %v1165 = vld [vmem:[#allocation5 + $0x108] sm:$0xff]
        %v1166 = vld [vmem:[#allocation5 + $0x110] sm:$0xff]
        %v1167 = vld [vmem:[#allocation5 + $0x118] sm:$0xff]
        %v1168 = vld [vmem:[#allocation5 + $0x120] sm:$0xff]
        %v1169 = vld [vmem:[#allocation5 + $0x128] sm:$0xff]
        %v1170 = vld [vmem:[#allocation5 + $0x130] sm:$0xff]
        %v1171 = vld [vmem:[#allocation5 + $0x138] sm:$0xff]
        %v1172 = vld [vmem:[#allocation5 + $0x140] sm:$0xff]
        %v1173 = vld [vmem:[#allocation5 + $0x148] sm:$0xff]
        %v1174 = vld [vmem:[#allocation5 + $0x150] sm:$0xff]
        %v1175 = vld [vmem:[#allocation5 + $0x158] sm:$0xff]
        %v1176 = vld [vmem:[#allocation5 + $0x160] sm:$0xff]
        %v1177 = vld [vmem:[#allocation5 + $0x168] sm:$0xff]
        %v1178 = vld [vmem:[#allocation5 + $0x170] sm:$0xff]
        %v1179 = vld [vmem:[#allocation5 + $0x178] sm:$0xff]
        %v1180 = vld [vmem:[#allocation5 + $0x180] sm:$0xff]
        %v1181 = vld [vmem:[#allocation5 + $0x188] sm:$0xff]
        %v1182 = vld [vmem:[#allocation5 + $0x190] sm:$0xff]
        %v1183 = vld [vmem:[#allocation5 + $0x198] sm:$0xff]
        %v1184 = vld [vmem:[#allocation5 + $0x1a0] sm:$0xff]
        %v1185 = vld [vmem:[#allocation5 + $0x1a8] sm:$0xff]
        %v1186 = vld [vmem:[#allocation5 + $0x1b0] sm:$0xff]
        %v1187 = vld [vmem:[#allocation5 + $0x1b8] sm:$0xff]
        %v1188 = vld [vmem:[#allocation5 + $0x1c0] sm:$0xff]
        %v1189 = vld [vmem:[#allocation5 + $0x1c8] sm:$0xff]
        %v1190 = vld [vmem:[#allocation5 + $0x1d0] sm:$0xff]
        %v1191 = vld [vmem:[#allocation5 + $0x1d8] sm:$0xff]
        %v1192 = vld [vmem:[#allocation5 + $0x1e0] sm:$0xff]
        %v1193 = vld [vmem:[#allocation5 + $0x1e8] sm:$0xff]
        %v1194 = vld [vmem:[#allocation5 + $0x1f0] sm:$0xff]
        %v1195 = vld [vmem:[#allocation5 + $0x1f8] sm:$0xff]
        %v1196 = vld [vmem:[#allocation5 + $0x200] sm:$0xff]
        %v1197 = vld [vmem:[#allocation5 + $0x208] sm:$0xff]
        %v1198 = vld [vmem:[#allocation5 + $0x210] sm:$0xff]
        %v1199 = vld [vmem:[#allocation5 + $0x218] sm:$0xff]
        %v1200 = vld [vmem:[#allocation5 + $0x220] sm:$0xff]
        %v1201 = vld [vmem:[#allocation5 + $0x228] sm:$0xff]
        %v1202 = vld [vmem:[#allocation5 + $0x230] sm:$0xff]
        %v1203 = vld [vmem:[#allocation5 + $0x238] sm:$0xff]
        %v1204 = vld [vmem:[#allocation5 + $0x240] sm:$0xff]
        %v1205 = vld [vmem:[#allocation5 + $0x248] sm:$0xff]
        %v1206 = vld [vmem:[#allocation5 + $0x250] sm:$0xff]
        %v1207 = vld [vmem:[#allocation5 + $0x258] sm:$0xff]
        %v1208 = vld [vmem:[#allocation5 + $0x260] sm:$0xff]
        %v1209 = vld [vmem:[#allocation5 + $0x268] sm:$0xff]
        %v1210 = vld [vmem:[#allocation5 + $0x270] sm:$0xff]
        %v1211 = vld [vmem:[#allocation5 + $0x278] sm:$0xff]
        %v1212 = vld [vmem:[#allocation5 + $0x280] sm:$0xff]
        %v1213 = vld [vmem:[#allocation5 + $0x288] sm:$0xff]
        %v1214 = vld [vmem:[#allocation5 + $0x290] sm:$0xff]
        %v1215 = vld [vmem:[#allocation5 + $0x298] sm:$0xff]
        %v1216 = vld [vmem:[#allocation5 + $0x2a0] sm:$0xff]
        %v1217 = vld [vmem:[#allocation5 + $0x2a8] sm:$0xff]
        %v1218 = vld [vmem:[#allocation5 + $0x2b0] sm:$0xff]
        %v1219 = vld [vmem:[#allocation5 + $0x2b8] sm:$0xff]
        %v1220 = vld [vmem:[#allocation5 + $0x2c0] sm:$0xff]
        %v1221 = vld [vmem:[#allocation5 + $0x2c8] sm:$0xff]
        %v1222 = vld [vmem:[#allocation5 + $0x2d0] sm:$0xff]
        %v1223 = vld [vmem:[#allocation5 + $0x2d8] sm:$0xff]
        %v1224 = vld [vmem:[#allocation5 + $0x2e0] sm:$0xff]
        %v1225 = vld [vmem:[#allocation5 + $0x2e8] sm:$0xff]
        %v1226 = vld [vmem:[#allocation5 + $0x2f0] sm:$0xff]
        %v1227 = vld [vmem:[#allocation5 + $0x2f8] sm:$0xff]
        %v1228 = vld [vmem:[#allocation5 + $0x300] sm:$0xff]
        %v1229 = vld [vmem:[#allocation5 + $0x308] sm:$0xff]
        %v1230 = vld [vmem:[#allocation5 + $0x310] sm:$0xff]
        %v1231 = vld [vmem:[#allocation5 + $0x318] sm:$0xff]
        %v1232 = vld [vmem:[#allocation5 + $0x320] sm:$0xff]
        %v1233 = vld [vmem:[#allocation5 + $0x328] sm:$0xff]
        %v1234 = vld [vmem:[#allocation5 + $0x330] sm:$0xff]
        %v1235 = vld [vmem:[#allocation5 + $0x338] sm:$0xff]
        %v1236 = vld [vmem:[#allocation5 + $0x340] sm:$0xff]
        %v1237 = vld [vmem:[#allocation5 + $0x348] sm:$0xff]
        %v1238 = vld [vmem:[#allocation5 + $0x350] sm:$0xff]
        %v1239 = vld [vmem:[#allocation5 + $0x358] sm:$0xff]
        %v1240 = vld [vmem:[#allocation5 + $0x360] sm:$0xff]
        %v1241 = vld [vmem:[#allocation5 + $0x368] sm:$0xff]
        %v1242 = vld [vmem:[#allocation5 + $0x370] sm:$0xff]
        %v1243 = vld [vmem:[#allocation5 + $0x378] sm:$0xff]
        %v1244 = vld [vmem:[#allocation5 + $0x380] sm:$0xff]
        %v1245 = vld [vmem:[#allocation5 + $0x388] sm:$0xff]
        %v1246 = vld [vmem:[#allocation5 + $0x390] sm:$0xff]
        %v1247 = vld [vmem:[#allocation5 + $0x398] sm:$0xff]
        %v1248 = vld [vmem:[#allocation5 + $0x3a0] sm:$0xff]
        %v1249 = vld [vmem:[#allocation5 + $0x3a8] sm:$0xff]
        %v1250 = vld [vmem:[#allocation5 + $0x3b0] sm:$0xff]
        %v1251 = vld [vmem:[#allocation5 + $0x3b8] sm:$0xff]
        %v1252 = vld [vmem:[#allocation5 + $0x3c0] sm:$0xff]
        %v1253 = vld [vmem:[#allocation5 + $0x3c8] sm:$0xff]
        %v1254 = vld [vmem:[#allocation5 + $0x3d0] sm:$0xff]
        %v1255 = vld [vmem:[#allocation5 + $0x3d8] sm:$0xff]
        %v1256 = vld [vmem:[#allocation5 + $0x3e0] sm:$0xff]
        %v1257 = vld [vmem:[#allocation5 + $0x3e8] sm:$0xff]
        %v1258 = vld [vmem:[#allocation5 + $0x3f0] sm:$0xff]
        %v1259 = vld [vmem:[#allocation5 + $0x3f8] sm:$0xff]
        %v1260 = vld [vmem:[#allocation5 + $0x400] sm:$0xff]
        %v1261 = vld [vmem:[#allocation5 + $0x408] sm:$0xff]
        %v1262 = vld [vmem:[#allocation5 + $0x410] sm:$0xff]
        %v1263 = vld [vmem:[#allocation5 + $0x418] sm:$0xff]
        %v1264 = vld [vmem:[#allocation5 + $0x420] sm:$0xff]
        %v1265 = vld [vmem:[#allocation5 + $0x428] sm:$0xff]
        %v1266 = vld [vmem:[#allocation5 + $0x430] sm:$0xff]
        %v1267 = vld [vmem:[#allocation5 + $0x438] sm:$0xff]
        %v1268 = vld [vmem:[#allocation5 + $0x440] sm:$0xff]
        %v1269 = vld [vmem:[#allocation5 + $0x448] sm:$0xff]
        %v1270 = vld [vmem:[#allocation5 + $0x450] sm:$0xff]
        %v1271 = vld [vmem:[#allocation5 + $0x458] sm:$0xff]
        %v1272 = vld [vmem:[#allocation5 + $0x460] sm:$0xff]
        %v1273 = vld [vmem:[#allocation5 + $0x468] sm:$0xff]
        %v1274 = vld [vmem:[#allocation5 + $0x470] sm:$0xff]
        %v1275 = vld [vmem:[#allocation5 + $0x478] sm:$0xff]
        %v1276 = vld [vmem:[#allocation5 + $0x480] sm:$0xff]
        %v1277 = vld [vmem:[#allocation5 + $0x488] sm:$0xff]
        %v1278 = vld [vmem:[#allocation5 + $0x490] sm:$0xff]
        %v1279 = vld [vmem:[#allocation5 + $0x498] sm:$0xff]
        %v1280 = vld [vmem:[#allocation5 + $0x4a0] sm:$0xff]
        %v1281 = vld [vmem:[#allocation5 + $0x4a8] sm:$0xff]
        %v1282 = vld [vmem:[#allocation5 + $0x4b0] sm:$0xff]
        %v1283 = vld [vmem:[#allocation5 + $0x4b8] sm:$0xff]
        %v1284 = vld [vmem:[#allocation5 + $0x4c0] sm:$0xff]
        %v1285 = vld [vmem:[#allocation5 + $0x4c8] sm:$0xff]
        %v1286 = vld [vmem:[#allocation5 + $0x4d0] sm:$0xff]
        %v1287 = vld [vmem:[#allocation5 + $0x4d8] sm:$0xff]
        %v1288 = vld [vmem:[#allocation5 + $0x4e0] sm:$0xff]
        %v1289 = vld [vmem:[#allocation5 + $0x4e8] sm:$0xff]
        %v1290 = vld [vmem:[#allocation5 + $0x4f0] sm:$0xff]
        %v1291 = vld [vmem:[#allocation5 + $0x4f8] sm:$0xff]
        %v1292 = vld [vmem:[#allocation5 + $0x500] sm:$0xff]
        %v1293 = vld [vmem:[#allocation5 + $0x508] sm:$0xff]
        %v1294 = vld [vmem:[#allocation5 + $0x510] sm:$0xff]
        %v1295 = vld [vmem:[#allocation5 + $0x518] sm:$0xff]
        %v1296 = vld [vmem:[#allocation5 + $0x520] sm:$0xff]
        %v1297 = vld [vmem:[#allocation5 + $0x528] sm:$0xff]
        %v1298 = vld [vmem:[#allocation5 + $0x530] sm:$0xff]
        %v1299 = vld [vmem:[#allocation5 + $0x538] sm:$0xff]
        %v1300 = vld [vmem:[#allocation5 + $0x540] sm:$0xff]
        %v1301 = vld [vmem:[#allocation5 + $0x548] sm:$0xff]
        %v1302 = vld [vmem:[#allocation5 + $0x550] sm:$0xff]
        %v1303 = vld [vmem:[#allocation5 + $0x558] sm:$0xff]
        %v1304 = vld [vmem:[#allocation5 + $0x560] sm:$0xff]
        %v1305 = vld [vmem:[#allocation5 + $0x568] sm:$0xff]
        %v1306 = vld [vmem:[#allocation5 + $0x570] sm:$0xff]
        %v1307 = vld [vmem:[#allocation5 + $0x578] sm:$0xff]
        %v1308 = vld [vmem:[#allocation5 + $0x580] sm:$0xff]
        %v1309 = vld [vmem:[#allocation5 + $0x588] sm:$0xff]
        %v1310 = vld [vmem:[#allocation5 + $0x590] sm:$0xff]
        %v1311 = vld [vmem:[#allocation5 + $0x598] sm:$0xff]
        %v1312 = vld [vmem:[#allocation5 + $0x5a0] sm:$0xff]
        %v1313 = vld [vmem:[#allocation5 + $0x5a8] sm:$0xff]
        %v1314 = vld [vmem:[#allocation5 + $0x5b0] sm:$0xff]
        %v1315 = vld [vmem:[#allocation5 + $0x5b8] sm:$0xff]
        %v1316 = vld [vmem:[#allocation5 + $0x5c0] sm:$0xff]
        %v1317 = vld [vmem:[#allocation5 + $0x5c8] sm:$0xff]
        %v1318 = vld [vmem:[#allocation5 + $0x5d0] sm:$0xff]
        %v1319 = vld [vmem:[#allocation5 + $0x5d8] sm:$0xff]
        %v1320 = vld [vmem:[#allocation5 + $0x5e0] sm:$0xff]
        %v1321 = vld [vmem:[#allocation5 + $0x5e8] sm:$0xff]
        %v1322 = vld [vmem:[#allocation5 + $0x5f0] sm:$0xff]
        %v1323 = vld [vmem:[#allocation5 + $0x5f8] sm:$0xff]
        %1324 = vmatprep.subr.mxu0 %v1133
        %1325 = vmatpush1.msra.mxu0 %v1132
        %1326 = vmatprep.subr.mxu0 %v1135
        %1327 = vmatpush1.msra.mxu0 %v1134
        %1328 = vmatprep.subr.mxu0 %v1137
        %1329 = vmatpush1.msra.mxu0 %v1136
        %1330 = vmatprep.subr.mxu0 %v1139
        %1331 = vmatpush1.msra.mxu0 %v1138
        %1332 = vmatprep.subr.mxu0 %v1141
        %1333 = vmatpush1.msra.mxu0 %v1140
        %1334 = vmatprep.subr.mxu0 %v1143
        %1335 = vmatpush1.msra.mxu0 %v1142
        %1336 = vmatprep.subr.mxu0 %v1145
        %1337 = vmatpush1.msra.mxu0 %v1144
        %1338 = vmatprep.subr.mxu0 %v1147
        %1339 = vmatpush1.msra.mxu0 %v1146
        %1340 = vmatprep.subr.mxu0 %v1149
        %1341 = vmatpush1.msra.mxu0 %v1148
        %1342 = vmatprep.subr.mxu0 %v1151
        %1343 = vmatpush1.msra.mxu0 %v1150
        %1344 = vmatprep.subr.mxu0 %v1153
        %1345 = vmatpush1.msra.mxu0 %v1152
        %1346 = vmatprep.subr.mxu0 %v1155
        %1347 = vmatpush1.msra.mxu0 %v1154
        %1348 = vmatprep.subr.mxu0 %v1157
        %1349 = vmatpush1.msra.mxu0 %v1156
        %1350 = vmatprep.subr.mxu0 %v1159
        %1351 = vmatpush1.msra.mxu0 %v1158
        %1352 = vmatprep.subr.mxu0 %v1161
        %1353 = vmatpush1.msra.mxu0 %v1160
        %1354 = vmatprep.subr.mxu0 %v1163
        %1355 = vmatpush1.msra.mxu0 %v1162
        %1356 = vmatprep.subr.mxu0 %v1165
        %1357 = vmatpush1.msra.mxu0 %v1164
        %1358 = vmatprep.subr.mxu0 %v1167
        %1359 = vmatpush1.msra.mxu0 %v1166
        %1360 = vmatprep.subr.mxu0 %v1169
        %1361 = vmatpush1.msra.mxu0 %v1168
        %1362 = vmatprep.subr.mxu0 %v1171
        %1363 = vmatpush1.msra.mxu0 %v1170
        %1364 = vmatprep.subr.mxu0 %v1173
        %1365 = vmatpush1.msra.mxu0 %v1172
        %1366 = vmatprep.subr.mxu0 %v1175
        %1367 = vmatpush1.msra.mxu0 %v1174
        %1368 = vmatprep.subr.mxu0 %v1177
        %1369 = vmatpush1.msra.mxu0 %v1176
        %1370 = vmatprep.subr.mxu0 %v1179
        %1371 = vmatpush1.msra.mxu0 %v1178
        %1372 = vmatprep.subr.mxu0 %v1181
        %1373 = vmatpush1.msra.mxu0 %v1180
        %1374 = vmatprep.subr.mxu0 %v1183
        %1375 = vmatpush1.msra.mxu0 %v1182
        %1376 = vmatprep.subr.mxu0 %v1185
        %1377 = vmatpush1.msra.mxu0 %v1184
        %1378 = vmatprep.subr.mxu0 %v1187
        %1379 = vmatpush1.msra.mxu0 %v1186
        %1380 = vmatprep.subr.mxu0 %v1189
        %1381 = vmatpush1.msra.mxu0 %v1188
        %1382 = vmatprep.subr.mxu0 %v1191
        %1383 = vmatpush1.msra.mxu0 %v1190
        %1384 = vmatprep.subr.mxu0 %v1193
        %1385 = vmatpush1.msra.mxu0 %v1192
        %1386 = vmatprep.subr.mxu0 %v1195
        %1387 = vmatpush1.msra.mxu0 %v1194
        %1388 = vmatprep.mubr.f32.mxu0 %v1119
        %1389 = vmatmul.mubr.f32.gmra.mrb[0].mxu0 %v1118
        %v1390 = vpop.f32.mrb[0].mxu0
        %v1391 = vadd.f32 0.0, %v1390
        %v1392 = vpop.f32.mrb[0].mxu0
        %v1393 = vadd.f32 0.0, %v1392
        %1394 = vmatprep.mubr.f32.mxu0 %v1113
        %1395 = vmatmul.mubr.f32.gmra.mrb[0].mxu0 %v1111
        %v1396 = vpop.f32.mrb[0].mxu0
        %v1397 = vadd.f32 0.0, %v1396
        %v1398 = vpop.f32.mrb[0].mxu0
        %v1399 = vadd.f32 0.0, %v1398
        %1400 = vdwg.mxu0
        %1401 = vmatprep.subr.mxu0 %v1197
        %1402 = vmatpush1.msra.mxu0 %v1196
        %1403 = vmatprep.subr.mxu0 %v1199
        %1404 = vmatpush1.msra.mxu0 %v1198
        %1405 = vmatprep.subr.mxu0 %v1201
        %1406 = vmatpush1.msra.mxu0 %v1200
        %1407 = vmatprep.subr.mxu0 %v1203
        %1408 = vmatpush1.msra.mxu0 %v1202
        %1409 = vmatprep.subr.mxu0 %v1205
        %1410 = vmatpush1.msra.mxu0 %v1204
        %1411 = vmatprep.subr.mxu0 %v1207
        %1412 = vmatpush1.msra.mxu0 %v1206
        %1413 = vmatprep.subr.mxu0 %v1209
        %1414 = vmatpush1.msra.mxu0 %v1208
        %1415 = vmatprep.subr.mxu0 %v1211
        %1416 = vmatpush1.msra.mxu0 %v1210
        %1417 = vmatprep.subr.mxu0 %v1213
        %1418 = vmatpush1.msra.mxu0 %v1212
        %1419 = vmatprep.subr.mxu0 %v1215
        %1420 = vmatpush1.msra.mxu0 %v1214
        %1421 = vmatprep.subr.mxu0 %v1217
        %1422 = vmatpush1.msra.mxu0 %v1216
        %1423 = vmatprep.subr.mxu0 %v1219
        %1424 = vmatpush1.msra.mxu0 %v1218
        %1425 = vmatprep.subr.mxu0 %v1221
        %1426 = vmatpush1.msra.mxu0 %v1220
        %1427 = vmatprep.subr.mxu0 %v1223
        %1428 = vmatpush1.msra.mxu0 %v1222
        %1429 = vmatprep.subr.mxu0 %v1225
        %1430 = vmatpush1.msra.mxu0 %v1224
        %1431 = vmatprep.subr.mxu0 %v1227
        %1432 = vmatpush1.msra.mxu0 %v1226
        %1433 = vmatprep.subr.mxu0 %v1229
        %1434 = vmatpush1.msra.mxu0 %v1228
        %1435 = vmatprep.subr.mxu0 %v1231
        %1436 = vmatpush1.msra.mxu0 %v1230
        %1437 = vmatprep.subr.mxu0 %v1233
        %1438 = vmatpush1.msra.mxu0 %v1232
        %1439 = vmatprep.subr.mxu0 %v1235
        %1440 = vmatpush1.msra.mxu0 %v1234
        %1441 = vmatprep.subr.mxu0 %v1237
        %1442 = vmatpush1.msra.mxu0 %v1236
        %1443 = vmatprep.subr.mxu0 %v1239
        %1444 = vmatpush1.msra.mxu0 %v1238
        %1445 = vmatprep.subr.mxu0 %v1241
        %1446 = vmatpush1.msra.mxu0 %v1240
        %1447 = vmatprep.subr.mxu0 %v1243
        %1448 = vmatpush1.msra.mxu0 %v1242
        %1449 = vmatprep.subr.mxu0 %v1245
        %1450 = vmatpush1.msra.mxu0 %v1244
        %1451 = vmatprep.subr.mxu0 %v1247
        %1452 = vmatpush1.msra.mxu0 %v1246
        %1453 = vmatprep.subr.mxu0 %v1249
        %1454 = vmatpush1.msra.mxu0 %v1248
        %1455 = vmatprep.subr.mxu0 %v1251
        %1456 = vmatpush1.msra.mxu0 %v1250
        %1457 = vmatprep.subr.mxu0 %v1253
        %1458 = vmatpush1.msra.mxu0 %v1252
        %1459 = vmatprep.subr.mxu0 %v1255
        %1460 = vmatpush1.msra.mxu0 %v1254
        %1461 = vmatprep.subr.mxu0 %v1257
        %1462 = vmatpush1.msra.mxu0 %v1256
        %1463 = vmatprep.subr.mxu0 %v1259
        %1464 = vmatpush1.msra.mxu0 %v1258
        %1465 = vmatprep.mubr.f32.mxu0 %v1101
        %1466 = vmatmul.mubr.f32.gmra.mrb[0].mxu0 %v1100
        %v1467 = vpop.f32.mrb[0].mxu0
        %v1468 = vadd.f32 %v1391, %v1467
        %v1469 = vpop.f32.mrb[0].mxu0
        %v1470 = vadd.f32 %v1393, %v1469
        %1471 = vmatprep.mubr.f32.mxu0 %v1103
        %1472 = vmatmul.mubr.f32.gmra.mrb[0].mxu0 %v1102
        %v1473 = vpop.f32.mrb[0].mxu0
        %v1474 = vadd.f32 %v1397, %v1473
        %v1475 = vpop.f32.mrb[0].mxu0
        %v1476 = vadd.f32 %v1399, %v1475
        %1477 = vdwg.mxu0
        %1478 = vmatprep.subr.mxu0 %v1261
        %1479 = vmatpush1.msra.mxu0 %v1260
        %1480 = vmatprep.subr.mxu0 %v1263
        %1481 = vmatpush1.msra.mxu0 %v1262
        %1482 = vmatprep.subr.mxu0 %v1265
        %1483 = vmatpush1.msra.mxu0 %v1264
        %1484 = vmatprep.subr.mxu0 %v1267
        %1485 = vmatpush1.msra.mxu0 %v1266
        %1486 = vmatprep.subr.mxu0 %v1269
        %1487 = vmatpush1.msra.mxu0 %v1268
        %1488 = vmatprep.subr.mxu0 %v1271
        %1489 = vmatpush1.msra.mxu0 %v1270
        %1490 = vmatprep.subr.mxu0 %v1273
        %1491 = vmatpush1.msra.mxu0 %v1272
        %1492 = vmatprep.subr.mxu0 %v1275
        %1493 = vmatpush1.msra.mxu0 %v1274
        %1494 = vmatprep.subr.mxu0 %v1277
        %1495 = vmatpush1.msra.mxu0 %v1276
        %1496 = vmatprep.subr.mxu0 %v1279
        %1497 = vmatpush1.msra.mxu0 %v1278
        %1498 = vmatprep.subr.mxu0 %v1281
        %1499 = vmatpush1.msra.mxu0 %v1280
        %1500 = vmatprep.subr.mxu0 %v1283
        %1501 = vmatpush1.msra.mxu0 %v1282
        %1502 = vmatprep.subr.mxu0 %v1285
        %1503 = vmatpush1.msra.mxu0 %v1284
        %1504 = vmatprep.subr.mxu0 %v1287
        %1505 = vmatpush1.msra.mxu0 %v1286
        %1506 = vmatprep.subr.mxu0 %v1289
        %1507 = vmatpush1.msra.mxu0 %v1288
        %1508 = vmatprep.subr.mxu0 %v1291
        %1509 = vmatpush1.msra.mxu0 %v1290
        %1510 = vmatprep.subr.mxu0 %v1293
        %1511 = vmatpush1.msra.mxu0 %v1292
        %1512 = vmatprep.subr.mxu0 %v1295
        %1513 = vmatpush1.msra.mxu0 %v1294
        %1514 = vmatprep.subr.mxu0 %v1297
        %1515 = vmatpush1.msra.mxu0 %v1296
        %1516 = vmatprep.subr.mxu0 %v1299
        %1517 = vmatpush1.msra.mxu0 %v1298
        %1518 = vmatprep.subr.mxu0 %v1301
        %1519 = vmatpush1.msra.mxu0 %v1300
        %1520 = vmatprep.subr.mxu0 %v1303
        %1521 = vmatpush1.msra.mxu0 %v1302
        %1522 = vmatprep.subr.mxu0 %v1305
        %1523 = vmatpush1.msra.mxu0 %v1304
        %1524 = vmatprep.subr.mxu0 %v1307
        %1525 = vmatpush1.msra.mxu0 %v1306
        %1526 = vmatprep.subr.mxu0 %v1309
        %1527 = vmatpush1.msra.mxu0 %v1308
        %1528 = vmatprep.subr.mxu0 %v1311
        %1529 = vmatpush1.msra.mxu0 %v1310
        %1530 = vmatprep.subr.mxu0 %v1313
        %1531 = vmatpush1.msra.mxu0 %v1312
        %1532 = vmatprep.subr.mxu0 %v1315
        %1533 = vmatpush1.msra.mxu0 %v1314
        %1534 = vmatprep.subr.mxu0 %v1317
        %1535 = vmatpush1.msra.mxu0 %v1316
        %1536 = vmatprep.subr.mxu0 %v1319
        %1537 = vmatpush1.msra.mxu0 %v1318
        %1538 = vmatprep.subr.mxu0 %v1321
        %1539 = vmatpush1.msra.mxu0 %v1320
        %1540 = vmatprep.subr.mxu0 %v1323
        %1541 = vmatpush1.msra.mxu0 %v1322
        %1542 = vmatprep.mubr.f32.mxu0 %v1125
        %1543 = vmatmul.mubr.f32.gmra.mrb[0].mxu0 %v1122
        %v1544 = vpop.f32.mrb[0].mxu0
        %v1545 = vadd.f32 %v1468, %v1544
        %v1546 = vpop.f32.mrb[0].mxu0
        %v1547 = vadd.f32 %v1470, %v1546
        %1548 = vmatprep.mubr.f32.mxu0 %v1131
        %1549 = vmatmul.mubr.f32.gmra.mrb[0].mxu0 %v1130
        %v1550 = vpop.f32.mrb[0].mxu0
        %v1551 = vadd.f32 %v1474, %v1550
        %v1552 = vpop.f32.mrb[0].mxu0
        %v1553 = vadd.f32 %v1476, %v1552
        %1554 = vdwg.mxu0
        %v1555 = vld [vmem:[%s5] sm:$0x3]
        %v1556 = vld [vmem:[%s6] sm:$0x3]
        %v1557 = vadd.f32 %v1545, %v1551
        %v1558 = vrot.slane %v1557, 4
        %v1559 = vadd.f32 %v1557, %v1558
        %v1560 = vrot.slane %v1559, 2
        %v1561 = vadd.f32 %v1559, %v1560
        %v1562 = vrot.slane %v1561, 1
        %v1563 = vadd.f32 %v1561, %v1562
        %v1564 = vadd.f32 %v1547, %v1553
        %v1565 = vrot.slane %v1564, 4
        %v1566 = vadd.f32 %v1564, %v1565
        %v1567 = vrot.slane %v1566, 2
        %v1568 = vadd.f32 %v1566, %v1567
        %v1569 = vrot.slane %v1568, 1
        %v1570 = vadd.f32 %v1568, %v1569
        %v1571 = vmul.f32 %v1545, %v1545
        %v1572 = vmul.f32 %v1547, %v1547
        %v1573 = vmul.f32 %v1551, %v1551
        %v1574 = vmul.f32 %v1553, %v1553
        %v1575 = vadd.f32 %v1571, %v1573
        %v1576 = vrot.slane %v1575, 4
        %v1577 = vadd.f32 %v1575, %v1576
        %v1578 = vrot.slane %v1577, 2
        %v1579 = vadd.f32 %v1577, %v1578
        %v1580 = vrot.slane %v1579, 1
        %v1581 = vadd.f32 %v1579, %v1580
        %v1582 = vadd.f32 %v1572, %v1574
        %v1583 = vrot.slane %v1582, 4
        %v1584 = vadd.f32 %v1582, %v1583
        %v1585 = vrot.slane %v1584, 2
        %v1586 = vadd.f32 %v1584, %v1585
        %v1587 = vrot.slane %v1586, 1
        %v1588 = vadd.f32 %v1586, %v1587
        %v1589 = vsel %vm369, %v1563, %v1581
        %v1590 = vsel %vm369, %v1570, %v1588
        %1591 = vmatprep.subr.mxu0 0.0
        %1592 = vmatpush1.msra.mxu0 %v854
        %1593 = vmatprep.subr.mxu0 0.0
        %1594 = vmatpush1.msra.mxu0 %v855
        %1595 = vmatprep.subr.mxu0 0.0
        %1596 = vmatpush1.msra.mxu0 %v856
        %1597 = vmatprep.subr.mxu0 0.0
        %1598 = vmatpush1.msra.mxu0 %v857
        %1599 = vmatprep.subr.mxu0 0.0
        %1600 = vmatpush1.msra.mxu0 %v858
        %1601 = vmatprep.subr.mxu0 0.0
        %1602 = vmatpush1.msra.mxu0 %v859
        %1603 = vmatprep.subr.mxu0 0.0
        %1604 = vmatpush1.msra.mxu0 %v860
        %1605 = vmatprep.subr.mxu0 0.0
        %1606 = vmatpush1.msra.mxu0 %v861
        %1607 = vmatprep.subr.mxu0 0.0
        %1608 = vmatpush1.msra.mxu0 %v862
        %1609 = vmatprep.subr.mxu0 0.0
        %1610 = vmatpush1.msra.mxu0 %v863
        %1611 = vmatprep.subr.mxu0 0.0
        %1612 = vmatpush1.msra.mxu0 %v864
        %1613 = vmatprep.subr.mxu0 0.0
        %1614 = vmatpush1.msra.mxu0 %v865
        %1615 = vmatprep.subr.mxu0 0.0
        %1616 = vmatpush1.msra.mxu0 %v866
        %1617 = vmatprep.subr.mxu0 0.0
        %1618 = vmatpush1.msra.mxu0 %v867
        %1619 = vmatprep.subr.mxu0 0.0
        %1620 = vmatpush1.msra.mxu0 %v868
        %1621 = vmatprep.subr.mxu0 0.0
        %1622 = vmatpush1.msra.mxu0 %v869
        %1623 = vmatprep.subr.mxu0 0.0
        %1624 = vmatpush1.msra.mxu0 %v870
        %1625 = vmatprep.subr.mxu0 0.0
        %1626 = vmatpush1.msra.mxu0 %v871
        %1627 = vmatprep.subr.mxu0 0.0
        %1628 = vmatpush1.msra.mxu0 %v872
        %1629 = vmatprep.subr.mxu0 0.0
        %1630 = vmatpush1.msra.mxu0 %v873
        %1631 = vmatprep.subr.mxu0 0.0
        %1632 = vmatpush1.msra.mxu0 %v874
        %1633 = vmatprep.subr.mxu0 0.0
        %1634 = vmatpush1.msra.mxu0 %v875
        %1635 = vmatprep.subr.mxu0 0.0
        %1636 = vmatpush1.msra.mxu0 %v876
        %1637 = vmatprep.subr.mxu0 0.0
        %1638 = vmatpush1.msra.mxu0 %v877
        %1639 = vmatprep.subr.mxu0 0.0
        %1640 = vmatpush1.msra.mxu0 %v878
        %1641 = vmatprep.subr.mxu0 0.0
        %1642 = vmatpush1.msra.mxu0 %v879
        %1643 = vmatprep.subr.mxu0 0.0
        %1644 = vmatpush1.msra.mxu0 %v880
        %1645 = vmatprep.subr.mxu0 0.0
        %1646 = vmatpush1.msra.mxu0 %v881
        %1647 = vmatprep.subr.mxu0 0.0
        %1648 = vmatpush1.msra.mxu0 %v882
        %1649 = vmatprep.subr.mxu0 0.0
        %1650 = vmatpush1.msra.mxu0 %v883
        %1651 = vmatprep.subr.mxu0 0.0
        %1652 = vmatpush1.msra.mxu0 %v884
        %1653 = vmatprep.subr.mxu0 0.0
        %1654 = vmatpush1.msra.mxu0 %v885
        %1655 = vmatprep.mubr.f32.mxu0 %v1590
        %1656 = vmatmul.mubr.f32.gmra.mrb[0].mxu0 %v1589
        %v1657 = vpop.f32.mrb[0].mxu0
        %v1658 = vadd.f32 0.0, %v1657
        %v1659 = vpop.f32.mrb[0].mxu0
        %1660 = vdwg.mxu0
        %v1661 = vmul.f32 %v1658, %v956
        %v1662 = vmul.f32 %v1661, %v1661
        %v1664 = vrot.slane %v1662, 7
        %v1666 = vsub.f32 %v1661, %v1664
        %v1667 = vmax.f32 %v1666, 0.0
        %v1668 = vsel %vm369, %v1661, %v1667
        %v1670 = vsel %vm967, %v1668, 0
        %1672 = vmatprep.subr.mxu0 %v966
        %1673 = vmatpush1.msra.mxu0 %v965
        %1674 = vmatprep.subr.mxu0 0.0
        %1675 = vmatpush1.msra.mxu0 0.0
        %1676 = vmatprep.subr.mxu0 0.0
        %1677 = vmatpush1.msra.mxu0 0.0
        %1678 = vmatprep.subr.mxu0 0.0
        %1679 = vmatpush1.msra.mxu0 0.0
        %1680 = vmatprep.subr.mxu0 0.0
        %1681 = vmatpush1.msra.mxu0 0.0
        %1682 = vmatprep.subr.mxu0 0.0
        %1683 = vmatpush1.msra.mxu0 0.0
        %1684 = vmatprep.subr.mxu0 0.0
        %1685 = vmatpush1.msra.mxu0 0.0
        %1686 = vmatprep.subr.mxu0 0.0
        %1687 = vmatpush1.msra.mxu0 0.0
        %1688 = vmatprep.subr.mxu0 0.0
        %1689 = vmatpush1.msra.mxu0 0.0
        %1690 = vmatprep.subr.mxu0 0.0
        %1691 = vmatpush1.msra.mxu0 0.0
        %1692 = vmatprep.subr.mxu0 0.0
        %1693 = vmatpush1.msra.mxu0 0.0
        %1694 = vmatprep.subr.mxu0 0.0
        %1695 = vmatpush1.msra.mxu0 0.0
        %1696 = vmatprep.subr.mxu0 0.0
        %1697 = vmatpush1.msra.mxu0 0.0
        %1698 = vmatprep.subr.mxu0 0.0
        %1699 = vmatpush1.msra.mxu0 0.0
        %1700 = vmatprep.subr.mxu0 0.0
        %1701 = vmatpush1.msra.mxu0 0.0
        %1702 = vmatprep.subr.mxu0 0.0
        %1703 = vmatpush1.msra.mxu0 0.0
        %1704 = vmatprep.subr.mxu0 0.0
        %1705 = vmatpush1.msra.mxu0 0.0
        %1706 = vmatprep.subr.mxu0 0.0
        %1707 = vmatpush1.msra.mxu0 0.0
        %1708 = vmatprep.subr.mxu0 0.0
        %1709 = vmatpush1.msra.mxu0 0.0
        %1710 = vmatprep.subr.mxu0 0.0
        %1711 = vmatpush1.msra.mxu0 0.0
        %1712 = vmatprep.subr.mxu0 0.0
        %1713 = vmatpush1.msra.mxu0 0.0
        %1714 = vmatprep.subr.mxu0 0.0
        %1715 = vmatpush1.msra.mxu0 0.0
        %1716 = vmatprep.subr.mxu0 0.0
        %1717 = vmatpush1.msra.mxu0 0.0
        %1718 = vmatprep.subr.mxu0 0.0
        %1719 = vmatpush1.msra.mxu0 0.0
        %1720 = vmatprep.subr.mxu0 0.0
        %1721 = vmatpush1.msra.mxu0 0.0
        %1722 = vmatprep.subr.mxu0 0.0
        %1723 = vmatpush1.msra.mxu0 0.0
        %1724 = vmatprep.subr.mxu0 0.0
        %1725 = vmatpush1.msra.mxu0 0.0
        %1726 = vmatprep.subr.mxu0 0.0
        %1727 = vmatpush1.msra.mxu0 0.0
        %1728 = vmatprep.subr.mxu0 0.0
        %1729 = vmatpush1.msra.mxu0 0.0
        %1730 = vmatprep.subr.mxu0 0.0
        %1731 = vmatpush1.msra.mxu0 0.0
        %1732 = vmatprep.subr.mxu0 0.0
        %1733 = vmatpush1.msra.mxu0 0.0
        %1734 = vmatprep.subr.mxu0 0.0
        %1735 = vmatpush1.msra.mxu0 0.0
        %1736 = vmatprep.mubr.f32.mxu0 0.0
        %1737 = vmatmul.mubr.f32.gmra.mrb[0].mxu0 %v1670
        %v1738 = vpop.f32.mrb[0].mxu0
        %v1739 = vadd.f32 0.0, %v1738
        %v1740 = vpop.f32.mrb[0].mxu0
        %v1741 = vadd.f32 0.0, %v1740
        %1742 = vdwg.mxu0
        %v1743 = vadd.f32 %v1739, 1e-05
        %v1744 = vadd.f32 %v1741, 1e-05
        %v1745 = vrsqrt.pop %v1743
        %v1746 = vrsqrt.pop %v1744
        %v1747 = vlaneseq
        %v1748 = vshrl.u32 %v1747, 7
        %v1749 = vsub.s32 0, %v1748
        %v1750 = vrot.slane %v1739, %v1749
        %v1751 = vlaneseq
        %v1752 = vshrl.u32 %v1751, 7
        %v1753 = vsub.s32 0, %v1752
        %v1754 = vrot.slane %v1741, %v1753
        %v1755 = vsub.f32 %v1545, %v1750
        %v1756 = vsub.f32 %v1547, %v1754
        %v1757 = vsub.f32 %v1551, %v1750
        %v1758 = vsub.f32 %v1553, %v1754
        %v1759 = vlaneseq
        %v1760 = vshrl.u32 %v1759, 7
        %v1761 = vsub.s32 1, %v1760
        %v1762 = vrot.slane %v1745, %v1761
        %v1763 = vlaneseq
        %v1764 = vshrl.u32 %v1763, 7
        %v1765 = vsub.s32 1, %v1764
        %v1766 = vrot.slane %v1746, %v1765
        %v1767 = vmul.f32 %v1755, %v1762
        %v1768 = vmul.f32 %v1756, %v1766
        %v1769 = vmul.f32 %v1757, %v1762
        %v1770 = vmul.f32 %v1758, %v1766
        %v1772 = vlaneseq
        %v1773 = vshrl.u32 %v1772, 7
        %v1774 = vsub.s32 0, %v1773
        %v1775 = vrot.slane %v1555, %v1774
        %v1776 = vlaneseq
        %v1777 = vshrl.u32 %v1776, 7
        %v1778 = vsub.s32 1, %v1777
        %v1779 = vrot.slane %v1555, %v1778
        %v1782 = vmul.f32 %v1767, %v1775
        %v1783 = vmul.f32 %v1768, %v1779
        %v1784 = vmul.f32 %v1769, %v1775
        %v1785 = vmul.f32 %v1770, %v1779
        %v1787 = vlaneseq
        %v1788 = vshrl.u32 %v1787, 7
        %v1789 = vsub.s32 0, %v1788
        %v1790 = vrot.slane %v1556, %v1789
        %v1791 = vlaneseq
        %v1792 = vshrl.u32 %v1791, 7
        %v1793 = vsub.s32 1, %v1792
        %v1794 = vrot.slane %v1556, %v1793
        %v1797 = vadd.f32 %v1782, %v1790
        %v1798 = vadd.f32 %v1783, %v1794
        %v1799 = vadd.f32 %v1784, %v1790
        %v1800 = vadd.f32 %v1785, %v1794
        %v1801 = vadd.f32 %v1797, %v361
        %v1802 = vadd.f32 %v1798, %v362
        %v1803 = vadd.f32 %v1799, %v363
        %v1804 = vadd.f32 %v1800, %v364
        %v1805 = vmax.f32 %v1801, 0.0
        %v1806 = vmax.f32 %v1802, 0.0
        %v1807 = vmax.f32 %v1803, 0.0
        %v1808 = vmax.f32 %v1804, 0.0
        %1809 = vst [vmem:[%s355] sm:$0xff] %v1805
        %1810 = vst [vmem:[%s355 + $0x8] sm:$0xff] %v1806
        %1811 = vst [vmem:[%s355 + $0x10] sm:$0xff] %v1807
        %1812 = vst [vmem:[%s355 + $0x18] sm:$0xff] %v1808
        %s1813 = sand.u32 %s227, 1
        %s1814 = scalar_lea.sflag [#allocation4], %s1813
        %s1815 = sand.u32 %s227, 1
        %s1816 = smul.addr %s1815, 32
        %s1817 = scalar_lea.vmem [#allocation7], %s1816
        // Predicated region
        $region65: #{tpu_custom_call.1} parent=55 // pred_check
          %p1818 = pneg %p237
        $region66: #{tpu_custom_call.1} parent=55 // pred_check_branch
          %1820 = sbr.rel (%p1818) target = $region68
        $region67: #{tpu_custom_call.1} parent=55 // pred_region
          %s1822 = ssub.s32 512, 512
          %1823 = vsyncadd %s1814, %s1822
          %s1824 = smul.addr %s25, 4
          %s1825 = smul.addr %s1824, 128
          %s1826 = scalar_lea.hbm %s9, %s1825
          %s1827 = sshll.u32 %s1817, 4
          %s1828 = int_to_ptr.vmem [resolvable:$true] %s1827
          %1833 = dma.vmem_to_hbm [thread:$0]  %s1828, 512, %s1826, %s1814, 256, 256, 16
        $region68: #{tpu_custom_call.1} parent=55 // pred_fallthru
          _
      $region56: #{tpu_custom_call.1} parent=5 // pred_fallthru
        _
      %p1834 = scmp.le.s32.totalorder 2, %s20
      // Predicated region
      $region69: #{tpu_custom_call.1} parent=5 // pred_check
        %p1835 = pneg %p1834
      $region70: #{tpu_custom_call.1} parent=5 // pred_check_branch
        %1837 = sbr.rel (%p1835) target = $region72
      $region71: #{tpu_custom_call.1} parent=5 // pred_region
        %s1838 = ssub.s32 %s20, 2
        // Predicated region
        $region73: #{tpu_custom_call.1} parent=71 // pred_check
          %p1839 = pneg %p243
        $region74: #{tpu_custom_call.1} parent=71 // pred_check_branch
          %1841 = sbr.rel (%p1839) target = $region76
        $region75: #{tpu_custom_call.1} parent=71 // pred_region
          %s1842 = sand.u32 %s228, 1
          %s1843 = scalar_lea.sflag [#allocation4], %s1842
          %s1844 = sand.u32 %s228, 1
          %s1845 = smul.addr %s1844, 32
          %s1846 = scalar_lea.vmem [#allocation7], %s1845
          %1847 = dma.done %s1843, 512
        $region76: #{tpu_custom_call.1} parent=71 // pred_fallthru
          _
      $region72: #{tpu_custom_call.1} parent=5 // pred_fallthru
        _
    $region6: #{tpu_custom_call.1} parent=1 // loop_footer
      %s24 = sadd.s32 1, %s20
    $region7: #{tpu_custom_call.1} parent=1 // loop_footer_branch
      %19 = sbr.rel target = $region3
    $region8: #{tpu_custom_call.1} parent=1 // loop_exit
      _
    %1848 = vsyncpa [#allocation3], 1
    %s1849 = scalar_lea.sflag [#allocation3], 1
    %1850 = vsyncpa %s1849, 1
    %1851 = vsyncpa [#allocation6], 1
    %1852 = vsyncpa [#allocation4], 1
    %s1853 = scalar_lea.sflag [#allocation4], 1
    %1854 = vsyncpa %s1853, 1

</llo_original>
